<compile_context>
chip_gen: v6e
topology: v6e:2x2x1
jax: 0.10.0
libtpu: 0.0.40
codegen_flags: <defaults>
</compile_context>

<pallas_src>
import functools

import jax
import jax.numpy as jnp
from jax.experimental import pallas as pl
from jax.experimental.pallas import tpu as pltpu


def _round_up(x: int, m: int) -> int:
    return ((x + m - 1) // m) * m


# ----------------------------------------------------------------------------
# Kernel A: per-frame feature extraction fused with the LSTM input projection.
#   emb  = pooled @ W_patch + b_patch        (MXU, bf16 x bf16 -> f32 accum)
#   feat = LayerNorm(emb) * gamma + beta     (DINOv2 LN eps = 1e-6)
#   gx   = feat @ W_ih_pad + b_lstm_pad      (non-recurrent half of the gates)
# Rows are time-major (row = t * B + b); output is bf16.
# ----------------------------------------------------------------------------
def frame_gates_kernel(pooled_ref, w_patch_ref, b_patch_ref, gamma_ref,
                       beta_ref, w_ih_ref, b_lstm_ref, out_ref):
    emb = jnp.dot(pooled_ref[...], w_patch_ref[...],
                  preferred_element_type=jnp.float32) + b_patch_ref[...]
    mu = jnp.mean(emb, axis=-1, keepdims=True)
    var = jnp.mean(jnp.square(emb - mu), axis=-1, keepdims=True)
    feat = (emb - mu) * jax.lax.rsqrt(var + 1e-6)
    feat = feat * gamma_ref[...] + beta_ref[...]
    gx = jnp.dot(feat.astype(jnp.bfloat16), w_ih_ref[...],
                 preferred_element_type=jnp.float32) + b_lstm_ref[...]
    out_ref[...] = gx.astype(out_ref.dtype)


def extract_frame_gates(pooled, w_patch, b_patch, gamma, beta,
                        w_ih_p, b_lstm_p, *, tile_bt=None):
    TB, Pd = pooled.shape
    D = w_patch.shape[1]
    G = w_ih_p.shape[1]                                   # 4 * Hp (padded)

    if tile_bt is None:
        # Budget ALL double-buffered traffic (bf16 input + bf16 output tile,
        # 2 buffers each) at ~24 MiB; weights are resident and counted in the
        # explicit vmem_limit below.  Works on v5e/v6e/v7x.
        row_bytes = 2 * (Pd * 2 + G * 2)
        tile_bt = (24 << 20) // max(1, row_bytes)
        tile_bt = max(8, min(1024, (tile_bt // 8) * 8))
        if TB > 8:
            # Keep >= 2 grid steps so the "parallel" axis can shard across
            # v7x's two TensorCores.
            tile_bt = min(tile_bt, _round_up(-(-TB // 2), 8))
    tile_bt = max(1, min(tile_bt, TB))

    est = (2 * tile_bt * (Pd + G) * 2                     # in/out tiles, bf16, x2 buf
           + 2 * (Pd * D + D * G) * 2                     # bf16 weights (x2 safety)
           + 2 * 4 * (3 * D + G))                         # f32 biases / LN params
    vmem_limit = int(min(48 << 20, max(32 << 20, 2 * est)))

    grid = (pl.cdiv(TB, tile_bt),)
    return pl.pallas_call(
        frame_gates_kernel,
        out_shape=jax.ShapeDtypeStruct((TB, G), jnp.bfloat16),
        grid=grid,
        in_specs=[
            pl.BlockSpec((tile_bt, Pd), lambda i: (i, 0)),
            pl.BlockSpec((Pd, D), lambda i: (0, 0)),
            pl.BlockSpec((1, D), lambda i: (0, 0)),
            pl.BlockSpec((1, D), lambda i: (0, 0)),
            pl.BlockSpec((1, D), lambda i: (0, 0)),
            pl.BlockSpec((D, G), lambda i: (0, 0)),
            pl.BlockSpec((1, G), lambda i: (0, 0)),
        ],
        out_specs=pl.BlockSpec((tile_bt, G), lambda i: (i, 0)),
        compiler_params=pltpu.CompilerParams(
            dimension_semantics=("parallel",),
            vmem_limit_bytes=vmem_limit),
    )(pooled, w_patch, b_patch, gamma, beta, w_ih_p, b_lstm_p)


# ----------------------------------------------------------------------------
# Kernel B: LSTM recurrence tiled over T (h/c carried in VMEM scratch across
# grid steps) followed by the classifier head on the last hidden state.
# PyTorch nn.LSTM gate order is (i, f, g, o); b_ih + b_hh were pre-summed and
# folded into gx by Kernel A.  Hp is a multiple of 128 so every gate slice is
# lane-aligned.
# TODO(synk): for large B on v7x, add a leading "parallel" batch-tile grid axis
# so both TensorCores run independent recurrences.
# ----------------------------------------------------------------------------
def lstm_head_kernel(gx_ref, w_hh_ref, w_cls_ref, b_cls_ref, out_ref,
                     h_sc, c_sc, *, t_total):
    Tt = gx_ref.shape[0]
    Hp = w_hh_ref.shape[0]
    t_blk = pl.program_id(0)

    @pl.when(t_blk == 0)
    def _():
        h_sc[...] = jnp.zeros_like(h_sc)
        c_sc[...] = jnp.zeros_like(c_sc)

    w_hh = w_hh_ref[...]                                  # (Hp, 4*Hp) bf16

    def step(tt, carry):
        h = h_sc[...]
        c = c_sc[...]
        gates = (gx_ref[tt].astype(jnp.float32)
                 + jnp.dot(h.astype(jnp.bfloat16), w_hh,
                           preferred_element_type=jnp.float32))
        i_g = jax.nn.sigmoid(gates[:, 0 * Hp:1 * Hp])     # lane-aligned slices
        f_g = jax.nn.sigmoid(gates[:, 1 * Hp:2 * Hp])
        g_g = jnp.tanh(gates[:, 2 * Hp:3 * Hp])
        o_g = jax.nn.sigmoid(gates[:, 3 * Hp:4 * Hp])
        c_new = f_g * c + i_g * g_g
        h_new = o_g * jnp.tanh(c_new)
        valid = (t_blk * Tt + tt) < t_total               # mask padded timesteps
        h_sc[...] = jnp.where(valid, h_new, h)
        c_sc[...] = jnp.where(valid, c_new, c)
        return carry

    # Bounded unroll: Tt is the (small) per-block timestep count, not T.
    jax.lax.fori_loop(0, Tt, step, 0, unroll=True)

    @pl.when(t_blk == pl.num_programs(0) - 1)
    def _():
        # Dropout (eval mode) is identity; classifier is a plain Linear.
        out_ref[...] = (jnp.dot(h_sc[...].astype(jnp.bfloat16), w_cls_ref[...],
                                preferred_element_type=jnp.float32)
                        + b_cls_ref[...])


def lstm_classify(gx, w_hh_p, w_cls_p, b_cls_p, *, tile_t=None):
    T, B, G = gx.shape
    Hp = w_hh_p.shape[0]
    NCp = w_cls_p.shape[1]

    if tile_t is None:
        tile_t = min(T, 8)
    tile_t = max(1, min(tile_t, T))

    est = (2 * tile_t * B * G * 2                         # gx tiles, bf16, x2 buf
           + 2 * (Hp * G + Hp * NCp) * 2                  # bf16 weights
           + 2 * B * Hp * 4 + B * NCp * 4 + 4 * NCp)      # scratch + out + bias
    vmem_limit = int(min(48 << 20, max(32 << 20, 2 * est)))

    kernel = functools.partial(lstm_head_kernel, t_total=T)
    return pl.pallas_call(
        kernel,
        out_shape=jax.ShapeDtypeStruct((B, NCp), jnp.float32),
        grid=(pl.cdiv(T, tile_t),),
        in_specs=[
            pl.BlockSpec((tile_t, B, G), lambda t: (t, 0, 0)),
            pl.BlockSpec((Hp, G), lambda t: (0, 0)),
            pl.BlockSpec((Hp, NCp), lambda t: (0, 0)),
            pl.BlockSpec((1, NCp), lambda t: (0, 0)),
        ],
        out_specs=pl.BlockSpec((B, NCp), lambda t: (0, 0)),
        scratch_shapes=[
            pltpu.VMEM((B, Hp), jnp.float32),             # h carry
            pltpu.VMEM((B, Hp), jnp.float32),             # c carry
        ],
        compiler_params=pltpu.CompilerParams(
            dimension_semantics=("arbitrary",),
            vmem_limit_bytes=vmem_limit),
    )(gx, w_hh_p, w_cls_p, b_cls_p)


# ----------------------------------------------------------------------------
# Wrapper: full VideoLSTMCustomDinov2.forward
# ----------------------------------------------------------------------------
def video_lstm_forward(pixel_values, params, tile_bt=None, tile_t=None):
    """pixel_values: [B, T, C, H, W] float32 -> logits [B, num_classes]."""
    B, T, C, Himg, Wimg = pixel_values.shape
    P = params["patch_size"]
    Hg, Wg = Himg // P, Wimg // P
    Pd = C * P * P

    H = params["w_hh"].shape[0]
    NC = params["w_cls"].shape[1]
    D = params["w_patch"].shape[1]
    Hp = _round_up(H, 128)        # lane-aligned gate slices
    NCp = _round_up(NC, 128)      # lane-dense (unmasked) output stores
    G = 4 * Hp

    # ---- mean patch-pool ("CLS" stand-in) in native pixel layout; mean over
    #      patch positions commutes with the linear patch-embed.  Time-major
    #      rows (row = t * B + b), feature order (C, ph, pw) matches the
    #      Conv2d weight flatten. ------------------------------------------
    pooled = pixel_values.reshape(B, T, C, Hg, P, Wg, P).mean(axis=(3, 5))
    pooled = pooled.transpose(1, 0, 2, 3, 4).reshape(T * B, Pd)
    pooled = pooled.astype(jnp.bfloat16)

    # ---- zero-pad LSTM / classifier params (padded lanes provably stay 0) --
    w_ih_p = jnp.zeros((D, 4, Hp), jnp.float32)
    w_ih_p = w_ih_p.at[:, :, :H].set(params["w_ih"].reshape(D, 4, H))
    w_ih_p = w_ih_p.reshape(D, G)
    w_hh_p = jnp.zeros((Hp, 4, Hp), jnp.float32)
    w_hh_p = w_hh_p.at[:H, :, :H].set(params["w_hh"].reshape(H, 4, H))
    w_hh_p = w_hh_p.reshape(Hp, G)
    b_lstm_p = jnp.zeros((4, Hp), jnp.float32)
    b_lstm_p = b_lstm_p.at[:, :H].set(params["b_lstm"].reshape(4, H))
    b_lstm_p = b_lstm_p.reshape(1, G)
    w_cls_p = jnp.zeros((Hp, NCp), jnp.float32)
    w_cls_p = w_cls_p.at[:H, :NC].set(params["w_cls"])
    b_cls_p = jnp.zeros((1, NCp), jnp.float32)
    b_cls_p = b_cls_p.at[:, :NC].set(params["b_cls"])

    # ---- Kernel A: frame features fused with the LSTM input projection -----
    gx = extract_frame_gates(
        pooled,
        params["w_patch"].astype(jnp.bfloat16),
        params["b_patch"], params["ln_gamma"], params["ln_beta"],
        w_ih_p.astype(jnp.bfloat16), b_lstm_p,
        tile_bt=tile_bt)                                  # (T*B, G) bf16
    gx = gx.reshape(T, B, G)                              # free (time-major rows)

    # ---- Kernel B: LSTM recurrence + classifier head ------------------------
    logits_p = lstm_classify(gx, w_hh_p.astype(jnp.bfloat16),
                             w_cls_p.astype(jnp.bfloat16), b_cls_p,
                             tile_t=tile_t)
    return logits_p[:, :NC]


def init_params(key, *, in_channels, patch_size, feature_dim,
                lstm_hidden, num_classes):
    ks = jax.random.split(key, 6)
    Pd = in_channels * patch_size * patch_size
    s = 1.0 / jnp.sqrt(lstm_hidden)                       # PyTorch-style U(-s, s)
    return {
        "patch_size": patch_size,
        # backbone stand-in (patch embed + final norm)
        "w_patch": (jax.random.normal(ks[0], (Pd, feature_dim), jnp.float32)
                    / jnp.sqrt(Pd)),
        "b_patch": jnp.zeros((1, feature_dim), jnp.float32),
        "ln_gamma": jnp.ones((1, feature_dim), jnp.float32),
        "ln_beta": jnp.zeros((1, feature_dim), jnp.float32),
        # LSTM (PyTorch gate order i,f,g,o), weights stored transposed,
        # b_ih + b_hh pre-summed into one bias.
        "w_ih": jax.random.uniform(ks[1], (feature_dim, 4 * lstm_hidden),
                                   jnp.float32, -s, s),
        "w_hh": jax.random.uniform(ks[2], (lstm_hidden, 4 * lstm_hidden),
                                   jnp.float32, -s, s),
        "b_lstm": jax.random.uniform(ks[3], (1, 4 * lstm_hidden),
                                     jnp.float32, -s, s),
        # classifier head (Dropout is identity at inference + Linear)
        "w_cls": jax.random.uniform(ks[4], (lstm_hidden, num_classes),
                                    jnp.float32, -s, s),
        "b_cls": jax.random.uniform(ks[5], (1, num_classes),
                                    jnp.float32, -s, s),
    }


def reference_forward(pixel_values, params):
    """Pure-JAX f32 reference of the same stand-in forward pass."""
    B, T, C, Himg, Wimg = pixel_values.shape
    P = params["patch_size"]
    Hg, Wg = Himg // P, Wimg // P
    Pd = C * P * P
    pooled = pixel_values.reshape(B, T, C, Hg, P, Wg, P).mean(axis=(3, 5))
    pooled = pooled.reshape(B, T, Pd)
    emb = pooled @ params["w_patch"] + params["b_patch"]
    mu = emb.mean(-1, keepdims=True)
    var = jnp.square(emb - mu).mean(-1, keepdims=True)
    feat = ((emb - mu) / jnp.sqrt(var + 1e-6)) * params["ln_gamma"] + params["ln_beta"]
    H = params["w_hh"].shape[0]
    h = jnp.zeros((B, H), jnp.float32)
    c = jnp.zeros((B, H), jnp.float32)
    for t in range(T):
        gates = feat[:, t, :] @ params["w_ih"] + h @ params["w_hh"] + params["b_lstm"]
        i_g = jax.nn.sigmoid(gates[:, 0 * H:1 * H])
        f_g = jax.nn.sigmoid(gates[:, 1 * H:2 * H])
        g_g = jnp.tanh(gates[:, 2 * H:3 * H])
        o_g = jax.nn.sigmoid(gates[:, 3 * H:4 * H])
        c = f_g * c + i_g * g_g
        h = o_g * jnp.tanh(c)
    return h @ params["w_cls"] + params["b_cls"]


if __name__ == "__main__":
    # Small shapes consistent with forward(pixel_values: [B, T, C, H, W]).
    B, T, C, HIMG, WIMG = 2, 8, 3, 16, 16
    PATCH = 8
    FEATURE_DIM = 64       # stands in for DINOv2 feature_dim (384 in real ckpt)
    LSTM_HIDDEN = 32
    NUM_CLASSES = 5

    key = jax.random.PRNGKey(0)
    k_param, k_x = jax.random.split(key)
    params = init_params(k_param, in_channels=C, patch_size=PATCH,
                         feature_dim=FEATURE_DIM, lstm_hidden=LSTM_HIDDEN,
                         num_classes=NUM_CLASSES)

    pixel_values = jax.random.normal(k_x, (B, T, C, HIMG, WIMG), jnp.float32)

    # tile_bt=8 (T*B=16 -> grid=(2,)) and tile_t=4 (T=8 -> grid=(2,)) exercise
    # the multi-block pipelined path in Kernel A and the scratch-carried
    # multi-step recurrence path in Kernel B.
    fwd = jax.jit(functools.partial(video_lstm_forward, params=params,
                                    tile_bt=8, tile_t=4))
    logits = fwd(pixel_values)
    jax.block_until_ready(logits)

    assert logits.shape == (B, NUM_CLASSES), logits.shape
    assert logits.dtype == jnp.float32
    assert bool(jnp.all(jnp.isfinite(logits)))

    ref = reference_forward(pixel_values, params)
    max_err = float(jnp.max(jnp.abs(logits - ref)))
    assert max_err < 0.1, f"max abs error vs f32 reference: {max_err}"
    print("KERNEL_OK")
</pallas_src>

<mosaic_0001>
module attributes {stable_mosaic.version = 11 : i64} {
  func.func @frame_gates_kernel(%arg0: i32, %arg1: memref<8x192xbf16, #tpu.memory_space<vmem>>, %arg2: memref<192x64xbf16, #tpu.memory_space<vmem>>, %arg3: memref<1x64xf32, #tpu.memory_space<vmem>>, %arg4: memref<1x64xf32, #tpu.memory_space<vmem>>, %arg5: memref<1x64xf32, #tpu.memory_space<vmem>>, %arg6: memref<64x512xbf16, #tpu.memory_space<vmem>>, %arg7: memref<1x512xf32, #tpu.memory_space<vmem>>, %arg8: memref<8x512xbf16, #tpu.memory_space<vmem>>) attributes {dimension_semantics = [#tpu.dimension_semantics<parallel>], iteration_bounds = array<i64: 2>, scalar_prefetch = 0 : i64, scratch_operands = 0 : i64, tpu.core_type = #tpu.core_type<tc>, window_params = [{transform_indices = @transform_0, window_bounds = array<i64: 8, 192>}, {pipeline_mode = #tpu.pipeline_mode<synchronous>, transform_indices = @transform_1, window_bounds = array<i64: 192, 64>}, {pipeline_mode = #tpu.pipeline_mode<synchronous>, transform_indices = @transform_2, window_bounds = array<i64: 1, 64>}, {pipeline_mode = #tpu.pipeline_mode<synchronous>, transform_indices = @transform_3, window_bounds = array<i64: 1, 64>}, {pipeline_mode = #tpu.pipeline_mode<synchronous>, transform_indices = @transform_4, window_bounds = array<i64: 1, 64>}, {pipeline_mode = #tpu.pipeline_mode<synchronous>, transform_indices = @transform_5, window_bounds = array<i64: 64, 512>}, {pipeline_mode = #tpu.pipeline_mode<synchronous>, transform_indices = @transform_6, window_bounds = array<i64: 1, 512>}, {transform_indices = @transform_7, window_bounds = array<i64: 8, 512>}]} {
    %c0 = arith.constant 0 : index
    %c0_0 = arith.constant 0 : index
    %0 = vector.load %arg1[%c0, %c0_0] : memref<8x192xbf16, #tpu.memory_space<vmem>>, vector<8x192xbf16>
    %c0_1 = arith.constant 0 : index
    %c0_2 = arith.constant 0 : index
    %1 = vector.load %arg2[%c0_1, %c0_2] : memref<192x64xbf16, #tpu.memory_space<vmem>>, vector<192x64xbf16>
    %cst = arith.constant dense<0.000000e+00> : vector<8x64xf32>
    %2 = tpu.matmul %0, %1, %cst {dimension_numbers = #tpu.dot_dimension_numbers<[1], [0], [0], [1], [0, 0, 1, 1], [], []>} : vector<8x192xbf16>, vector<192x64xbf16>, vector<8x64xf32> -> vector<8x64xf32>
    %c0_3 = arith.constant 0 : index
    %c0_4 = arith.constant 0 : index
    %3 = vector.load %arg3[%c0_3, %c0_4] : memref<1x64xf32, #tpu.memory_space<vmem>>, vector<1x64xf32>
    %4 = vector.broadcast %3 : vector<1x64xf32> to vector<8x64xf32>
    %5 = arith.addf %2, %4 : vector<8x64xf32>
    %cst_5 = arith.constant dense<0.000000e+00> : vector<8xf32>
    %6 = vector.multi_reduction <add>, %5, %cst_5 [1] : vector<8x64xf32> to vector<8xf32>
    %7 = vector.shape_cast %6 : vector<8xf32> to vector<8x1xf32>
    %cst_6 = arith.constant 6.400000e+01 : f32
    %8 = vector.broadcast %cst_6 : f32 to vector<8x1xf32>
    %9 = arith.divf %7, %8 : vector<8x1xf32>
    %10 = vector.broadcast %9 : vector<8x1xf32> to vector<8x64xf32>
    %11 = arith.subf %5, %10 : vector<8x64xf32>
    %12 = arith.mulf %11, %11 : vector<8x64xf32>
    %cst_7 = arith.constant dense<0.000000e+00> : vector<8xf32>
    %13 = vector.multi_reduction <add>, %12, %cst_7 [1] : vector<8x64xf32> to vector<8xf32>
    %14 = vector.shape_cast %13 : vector<8xf32> to vector<8x1xf32>
    %cst_8 = arith.constant 6.400000e+01 : f32
    %15 = vector.broadcast %cst_8 : f32 to vector<8x1xf32>
    %16 = arith.divf %14, %15 : vector<8x1xf32>
    %17 = vector.broadcast %9 : vector<8x1xf32> to vector<8x64xf32>
    %18 = arith.subf %5, %17 : vector<8x64xf32>
    %cst_9 = arith.constant 9.99999997E-7 : f32
    %19 = vector.broadcast %cst_9 : f32 to vector<8x1xf32>
    %20 = arith.addf %16, %19 : vector<8x1xf32>
    %21 = math.rsqrt %20 : vector<8x1xf32>
    %22 = vector.broadcast %21 : vector<8x1xf32> to vector<8x64xf32>
    %23 = arith.mulf %18, %22 : vector<8x64xf32>
    %c0_10 = arith.constant 0 : index
    %c0_11 = arith.constant 0 : index
    %24 = vector.load %arg4[%c0_10, %c0_11] : memref<1x64xf32, #tpu.memory_space<vmem>>, vector<1x64xf32>
    %25 = vector.broadcast %24 : vector<1x64xf32> to vector<8x64xf32>
    %26 = arith.mulf %23, %25 : vector<8x64xf32>
    %c0_12 = arith.constant 0 : index
    %c0_13 = arith.constant 0 : index
    %27 = vector.load %arg5[%c0_12, %c0_13] : memref<1x64xf32, #tpu.memory_space<vmem>>, vector<1x64xf32>
    %28 = vector.broadcast %27 : vector<1x64xf32> to vector<8x64xf32>
    %29 = arith.addf %26, %28 : vector<8x64xf32>
    %30 = arith.truncf %29 : vector<8x64xf32> to vector<8x64xbf16>
    %c0_14 = arith.constant 0 : index
    %c0_15 = arith.constant 0 : index
    %31 = vector.load %arg6[%c0_14, %c0_15] : memref<64x512xbf16, #tpu.memory_space<vmem>>, vector<64x512xbf16>
    %cst_16 = arith.constant dense<0.000000e+00> : vector<8x512xf32>
    %32 = tpu.matmul %30, %31, %cst_16 {dimension_numbers = #tpu.dot_dimension_numbers<[1], [0], [0], [1], [0, 0, 1, 1], [], []>} : vector<8x64xbf16>, vector<64x512xbf16>, vector<8x512xf32> -> vector<8x512xf32>
    %c0_17 = arith.constant 0 : index
    %c0_18 = arith.constant 0 : index
    %33 = vector.load %arg7[%c0_17, %c0_18] : memref<1x512xf32, #tpu.memory_space<vmem>>, vector<1x512xf32>
    %34 = vector.broadcast %33 : vector<1x512xf32> to vector<8x512xf32>
    %35 = arith.addf %32, %34 : vector<8x512xf32>
    %36 = arith.truncf %35 : vector<8x512xf32> to vector<8x512xbf16>
    %c0_19 = arith.constant 0 : index
    %c0_20 = arith.constant 0 : index
    %37 = vector.load %arg8[%c0_19, %c0_20] : memref<8x512xbf16, #tpu.memory_space<vmem>>, vector<8x512xbf16>
    tpu.vector_store %arg8[%c0_19, %c0_20], %36 {strides = array<i32>} : memref<8x512xbf16, #tpu.memory_space<vmem>>, vector<8x512xbf16>,
    return
  }
  func.func @transform_0(%arg0: i32) -> (i32, i32) {
    %c0_i32 = arith.constant 0 : i32
    %c0_i32_0 = arith.constant 0 : i32
    return %arg0, %c0_i32 : i32, i32
  }
  func.func @transform_1(%arg0: i32) -> (i32, i32) {
    %c0_i32 = arith.constant 0 : i32
    %c0_i32_0 = arith.constant 0 : i32
    %c0_i32_1 = arith.constant 0 : i32
    return %c0_i32, %c0_i32_0 : i32, i32
  }
  func.func @transform_2(%arg0: i32) -> (i32, i32) {
    %c0_i32 = arith.constant 0 : i32
    %c0_i32_0 = arith.constant 0 : i32
    %c0_i32_1 = arith.constant 0 : i32
    return %c0_i32, %c0_i32_0 : i32, i32
  }
  func.func @transform_3(%arg0: i32) -> (i32, i32) {
    %c0_i32 = arith.constant 0 : i32
    %c0_i32_0 = arith.constant 0 : i32
    %c0_i32_1 = arith.constant 0 : i32
    return %c0_i32, %c0_i32_0 : i32, i32
  }
  func.func @transform_4(%arg0: i32) -> (i32, i32) {
    %c0_i32 = arith.constant 0 : i32
    %c0_i32_0 = arith.constant 0 : i32
    %c0_i32_1 = arith.constant 0 : i32
    return %c0_i32, %c0_i32_0 : i32, i32
  }
  func.func @transform_5(%arg0: i32) -> (i32, i32) {
    %c0_i32 = arith.constant 0 : i32
    %c0_i32_0 = arith.constant 0 : i32
    %c0_i32_1 = arith.constant 0 : i32
    return %c0_i32, %c0_i32_0 : i32, i32
  }
  func.func @transform_6(%arg0: i32) -> (i32, i32) {
    %c0_i32 = arith.constant 0 : i32
    %c0_i32_0 = arith.constant 0 : i32
    %c0_i32_1 = arith.constant 0 : i32
    return %c0_i32, %c0_i32_0 : i32, i32
  }
  func.func @transform_7(%arg0: i32) -> (i32, i32) {
    %c0_i32 = arith.constant 0 : i32
    %c0_i32_0 = arith.constant 0 : i32
    return %arg0, %c0_i32 : i32, i32
  }
}

module attributes {stable_mosaic.version = 11 : i64} {
  func.func @lstm_head_kernel(%arg0: i32, %arg1: memref<4x2x512xbf16, #tpu.memory_space<vmem>>, %arg2: memref<128x512xbf16, #tpu.memory_space<vmem>>, %arg3: memref<128x128xbf16, #tpu.memory_space<vmem>>, %arg4: memref<1x128xf32, #tpu.memory_space<vmem>>, %arg5: memref<2x128xf32, #tpu.memory_space<vmem>>, %arg6: memref<2x128xf32, #tpu.memory_space<vmem>>, %arg7: memref<2x128xf32, #tpu.memory_space<vmem>>) attributes {dimension_semantics = [#tpu.dimension_semantics<arbitrary>], iteration_bounds = array<i64: 2>, scalar_prefetch = 0 : i64, scratch_operands = 2 : i64, tpu.core_type = #tpu.core_type<tc>, window_params = [{transform_indices = @transform_0, window_bounds = array<i64: 4, 2, 512>}, {pipeline_mode = #tpu.pipeline_mode<synchronous>, transform_indices = @transform_1, window_bounds = array<i64: 128, 512>}, {pipeline_mode = #tpu.pipeline_mode<synchronous>, transform_indices = @transform_2, window_bounds = array<i64: 128, 128>}, {pipeline_mode = #tpu.pipeline_mode<synchronous>, transform_indices = @transform_3, window_bounds = array<i64: 1, 128>}, {pipeline_mode = #tpu.pipeline_mode<synchronous>, transform_indices = @transform_4, window_bounds = array<i64: 2, 128>}]} {
    %c0_i32 = arith.constant 0 : i32
    %0 = arith.cmpi eq, %arg0, %c0_i32 : i32
    %1 = arith.extui %0 : i1 to i32
    %c0_i32_0 = arith.constant 0 : i32
    %2 = arith.cmpi ne, %1, %c0_i32_0 : i32
    scf.if %2 {
      %cst_67 = arith.constant 0.000000e+00 : f32
      %171 = vector.broadcast %cst_67 : f32 to vector<2x128xf32>
      %c0_68 = arith.constant 0 : index
      %c0_69 = arith.constant 0 : index
      %172 = vector.load %arg6[%c0_68, %c0_69] : memref<2x128xf32, #tpu.memory_space<vmem>>, vector<2x128xf32>
      tpu.vector_store %arg6[%c0_68, %c0_69], %171 {strides = array<i32>} : memref<2x128xf32, #tpu.memory_space<vmem>>, vector<2x128xf32>,
      %cst_70 = arith.constant 0.000000e+00 : f32
      %173 = vector.broadcast %cst_70 : f32 to vector<2x128xf32>
      %c0_71 = arith.constant 0 : index
      %c0_72 = arith.constant 0 : index
      %174 = vector.load %arg7[%c0_71, %c0_72] : memref<2x128xf32, #tpu.memory_space<vmem>>, vector<2x128xf32>
      tpu.vector_store %arg7[%c0_71, %c0_72], %173 {strides = array<i32>} : memref<2x128xf32, #tpu.memory_space<vmem>>, vector<2x128xf32>,
    } else {
    }
    %c0 = arith.constant 0 : index
    %c0_1 = arith.constant 0 : index
    %3 = vector.load %arg2[%c0, %c0_1] : memref<128x512xbf16, #tpu.memory_space<vmem>>, vector<128x512xbf16>
    %c0_i32_2 = arith.constant 0 : i32
    %c0_3 = arith.constant 0 : index
    %c0_4 = arith.constant 0 : index
    %4 = vector.load %arg6[%c0_3, %c0_4] : memref<2x128xf32, #tpu.memory_space<vmem>>, vector<2x128xf32>
    %c0_5 = arith.constant 0 : index
    %c0_6 = arith.constant 0 : index
    %5 = vector.load %arg7[%c0_5, %c0_6] : memref<2x128xf32, #tpu.memory_space<vmem>>, vector<2x128xf32>
    %6 = arith.index_cast %c0_i32_2 : i32 to index
    %c0_7 = arith.constant 0 : index
    %c0_8 = arith.constant 0 : index
    %7 = vector.load %arg1[%6, %c0_7, %c0_8] : memref<4x2x512xbf16, #tpu.memory_space<vmem>>, vector<1x2x512xbf16>
    %8 = vector.shape_cast %7 : vector<1x2x512xbf16> to vector<2x512xbf16>
    %9 = arith.extf %8 : vector<2x512xbf16> to vector<2x512xf32>
    %10 = arith.truncf %4 : vector<2x128xf32> to vector<2x128xbf16>
    %cst = arith.constant dense<0.000000e+00> : vector<2x512xf32>
    %11 = tpu.matmul %10, %3, %cst {dimension_numbers = #tpu.dot_dimension_numbers<[1], [0], [0], [1], [0, 0, 1, 1], [], []>} : vector<2x128xbf16>, vector<128x512xbf16>, vector<2x512xf32> -> vector<2x512xf32>
    %12 = arith.addf %9, %11 : vector<2x512xf32>
    %13 = vector.extract_strided_slice %12 {offsets = [0, 0], sizes = [2, 128], strides = [1, 1]} : vector<2x512xf32> to vector<2x128xf32>
    %14 = arith.negf %13 : vector<2x128xf32>
    %15 = math.exp %14 : vector<2x128xf32>
    %cst_9 = arith.constant 1.000000e+00 : f32
    %16 = vector.broadcast %cst_9 : f32 to vector<2x128xf32>
    %17 = arith.addf %16, %15 : vector<2x128xf32>
    %18 = arith.divf %16, %17 : vector<2x128xf32>
    %19 = vector.extract_strided_slice %12 {offsets = [0, 128], sizes = [2, 128], strides = [1, 1]} : vector<2x512xf32> to vector<2x128xf32>
    %20 = arith.negf %19 : vector<2x128xf32>
    %21 = math.exp %20 : vector<2x128xf32>
    %cst_10 = arith.constant 1.000000e+00 : f32
    %22 = vector.broadcast %cst_10 : f32 to vector<2x128xf32>
    %23 = arith.addf %22, %21 : vector<2x128xf32>
    %24 = arith.divf %22, %23 : vector<2x128xf32>
    %25 = vector.extract_strided_slice %12 {offsets = [0, 256], sizes = [2, 128], strides = [1, 1]} : vector<2x512xf32> to vector<2x128xf32>
    %26 = math.tanh %25 : vector<2x128xf32>
    %27 = vector.extract_strided_slice %12 {offsets = [0, 384], sizes = [2, 128], strides = [1, 1]} : vector<2x512xf32> to vector<2x128xf32>
    %28 = arith.negf %27 : vector<2x128xf32>
    %29 = math.exp %28 : vector<2x128xf32>
    %cst_11 = arith.constant 1.000000e+00 : f32
    %30 = vector.broadcast %cst_11 : f32 to vector<2x128xf32>
    %31 = arith.addf %30, %29 : vector<2x128xf32>
    %32 = arith.divf %30, %31 : vector<2x128xf32>
    %33 = arith.mulf %24, %5 : vector<2x128xf32>
    %34 = arith.mulf %18, %26 : vector<2x128xf32>
    %35 = arith.addf %33, %34 : vector<2x128xf32>
    %36 = math.tanh %35 : vector<2x128xf32>
    %37 = arith.mulf %32, %36 : vector<2x128xf32>
    %c4_i32 = arith.constant 4 : i32
    %38 = arith.muli %arg0, %c4_i32 : i32
    %39 = arith.addi %38, %c0_i32_2 : i32
    %c8_i32 = arith.constant 8 : i32
    %40 = arith.cmpi slt, %39, %c8_i32 : i32
    %41 = arith.select %40, %37, %4 : vector<2x128xf32>
    %c0_12 = arith.constant 0 : index
    %c0_13 = arith.constant 0 : index
    %42 = vector.load %arg6[%c0_12, %c0_13] : memref<2x128xf32, #tpu.memory_space<vmem>>, vector<2x128xf32>
    tpu.vector_store %arg6[%c0_12, %c0_13], %41 {strides = array<i32>} : memref<2x128xf32, #tpu.memory_space<vmem>>, vector<2x128xf32>,
    %43 = arith.select %40, %35, %5 : vector<2x128xf32>
    %c0_14 = arith.constant 0 : index
    %c0_15 = arith.constant 0 : index
    %44 = vector.load %arg7[%c0_14, %c0_15] : memref<2x128xf32, #tpu.memory_space<vmem>>, vector<2x128xf32>
    tpu.vector_store %arg7[%c0_14, %c0_15], %43 {strides = array<i32>} : memref<2x128xf32, #tpu.memory_space<vmem>>, vector<2x128xf32>,
    %c1_i32 = arith.constant 1 : i32
    %c0_16 = arith.constant 0 : index
    %c0_17 = arith.constant 0 : index
    %45 = vector.load %arg6[%c0_16, %c0_17] : memref<2x128xf32, #tpu.memory_space<vmem>>, vector<2x128xf32>
    %c0_18 = arith.constant 0 : index
    %c0_19 = arith.constant 0 : index
    %46 = vector.load %arg7[%c0_18, %c0_19] : memref<2x128xf32, #tpu.memory_space<vmem>>, vector<2x128xf32>
    %47 = arith.index_cast %c1_i32 : i32 to index
    %c0_20 = arith.constant 0 : index
    %c0_21 = arith.constant 0 : index
    %48 = vector.load %arg1[%47, %c0_20, %c0_21] : memref<4x2x512xbf16, #tpu.memory_space<vmem>>, vector<1x2x512xbf16>
    %49 = vector.shape_cast %48 : vector<1x2x512xbf16> to vector<2x512xbf16>
    %50 = arith.extf %49 : vector<2x512xbf16> to vector<2x512xf32>
    %51 = arith.truncf %45 : vector<2x128xf32> to vector<2x128xbf16>
    %cst_22 = arith.constant dense<0.000000e+00> : vector<2x512xf32>
    %52 = tpu.matmul %51, %3, %cst_22 {dimension_numbers = #tpu.dot_dimension_numbers<[1], [0], [0], [1], [0, 0, 1, 1], [], []>} : vector<2x128xbf16>, vector<128x512xbf16>, vector<2x512xf32> -> vector<2x512xf32>
    %53 = arith.addf %50, %52 : vector<2x512xf32>
    %54 = vector.extract_strided_slice %53 {offsets = [0, 0], sizes = [2, 128], strides = [1, 1]} : vector<2x512xf32> to vector<2x128xf32>
    %55 = arith.negf %54 : vector<2x128xf32>
    %56 = math.exp %55 : vector<2x128xf32>
    %cst_23 = arith.constant 1.000000e+00 : f32
    %57 = vector.broadcast %cst_23 : f32 to vector<2x128xf32>
    %58 = arith.addf %57, %56 : vector<2x128xf32>
    %59 = arith.divf %57, %58 : vector<2x128xf32>
    %60 = vector.extract_strided_slice %53 {offsets = [0, 128], sizes = [2, 128], strides = [1, 1]} : vector<2x512xf32> to vector<2x128xf32>
    %61 = arith.negf %60 : vector<2x128xf32>
    %62 = math.exp %61 : vector<2x128xf32>
    %cst_24 = arith.constant 1.000000e+00 : f32
    %63 = vector.broadcast %cst_24 : f32 to vector<2x128xf32>
    %64 = arith.addf %63, %62 : vector<2x128xf32>
    %65 = arith.divf %63, %64 : vector<2x128xf32>
    %66 = vector.extract_strided_slice %53 {offsets = [0, 256], sizes = [2, 128], strides = [1, 1]} : vector<2x512xf32> to vector<2x128xf32>
    %67 = math.tanh %66 : vector<2x128xf32>
    %68 = vector.extract_strided_slice %53 {offsets = [0, 384], sizes = [2, 128], strides = [1, 1]} : vector<2x512xf32> to vector<2x128xf32>
    %69 = arith.negf %68 : vector<2x128xf32>
    %70 = math.exp %69 : vector<2x128xf32>
    %cst_25 = arith.constant 1.000000e+00 : f32
    %71 = vector.broadcast %cst_25 : f32 to vector<2x128xf32>
    %72 = arith.addf %71, %70 : vector<2x128xf32>
    %73 = arith.divf %71, %72 : vector<2x128xf32>
    %74 = arith.mulf %65, %46 : vector<2x128xf32>
    %75 = arith.mulf %59, %67 : vector<2x128xf32>
    %76 = arith.addf %74, %75 : vector<2x128xf32>
    %77 = math.tanh %76 : vector<2x128xf32>
    %78 = arith.mulf %73, %77 : vector<2x128xf32>
    %c4_i32_26 = arith.constant 4 : i32
    %79 = arith.muli %arg0, %c4_i32_26 : i32
    %80 = arith.addi %79, %c1_i32 : i32
    %c8_i32_27 = arith.constant 8 : i32
    %81 = arith.cmpi slt, %80, %c8_i32_27 : i32
    %82 = arith.select %81, %78, %45 : vector<2x128xf32>
    %c0_28 = arith.constant 0 : index
    %c0_29 = arith.constant 0 : index
    %83 = vector.load %arg6[%c0_28, %c0_29] : memref<2x128xf32, #tpu.memory_space<vmem>>, vector<2x128xf32>
    tpu.vector_store %arg6[%c0_28, %c0_29], %82 {strides = array<i32>} : memref<2x128xf32, #tpu.memory_space<vmem>>, vector<2x128xf32>,
    %84 = arith.select %81, %76, %46 : vector<2x128xf32>
    %c0_30 = arith.constant 0 : index
    %c0_31 = arith.constant 0 : index
    %85 = vector.load %arg7[%c0_30, %c0_31] : memref<2x128xf32, #tpu.memory_space<vmem>>, vector<2x128xf32>
    tpu.vector_store %arg7[%c0_30, %c0_31], %84 {strides = array<i32>} : memref<2x128xf32, #tpu.memory_space<vmem>>, vector<2x128xf32>,
    %c2_i32 = arith.constant 2 : i32
    %c0_32 = arith.constant 0 : index
    %c0_33 = arith.constant 0 : index
    %86 = vector.load %arg6[%c0_32, %c0_33] : memref<2x128xf32, #tpu.memory_space<vmem>>, vector<2x128xf32>
    %c0_34 = arith.constant 0 : index
    %c0_35 = arith.constant 0 : index
    %87 = vector.load %arg7[%c0_34, %c0_35] : memref<2x128xf32, #tpu.memory_space<vmem>>, vector<2x128xf32>
    %88 = arith.index_cast %c2_i32 : i32 to index
    %c0_36 = arith.constant 0 : index
    %c0_37 = arith.constant 0 : index
    %89 = vector.load %arg1[%88, %c0_36, %c0_37] : memref<4x2x512xbf16, #tpu.memory_space<vmem>>, vector<1x2x512xbf16>
    %90 = vector.shape_cast %89 : vector<1x2x512xbf16> to vector<2x512xbf16>
    %91 = arith.extf %90 : vector<2x512xbf16> to vector<2x512xf32>
    %92 = arith.truncf %86 : vector<2x128xf32> to vector<2x128xbf16>
    %cst_38 = arith.constant dense<0.000000e+00> : vector<2x512xf32>
    %93 = tpu.matmul %92, %3, %cst_38 {dimension_numbers = #tpu.dot_dimension_numbers<[1], [0], [0], [1], [0, 0, 1, 1], [], []>} : vector<2x128xbf16>, vector<128x512xbf16>, vector<2x512xf32> -> vector<2x512xf32>
    %94 = arith.addf %91, %93 : vector<2x512xf32>
    %95 = vector.extract_strided_slice %94 {offsets = [0, 0], sizes = [2, 128], strides = [1, 1]} : vector<2x512xf32> to vector<2x128xf32>
    %96 = arith.negf %95 : vector<2x128xf32>
    %97 = math.exp %96 : vector<2x128xf32>
    %cst_39 = arith.constant 1.000000e+00 : f32
    %98 = vector.broadcast %cst_39 : f32 to vector<2x128xf32>
    %99 = arith.addf %98, %97 : vector<2x128xf32>
    %100 = arith.divf %98, %99 : vector<2x128xf32>
    %101 = vector.extract_strided_slice %94 {offsets = [0, 128], sizes = [2, 128], strides = [1, 1]} : vector<2x512xf32> to vector<2x128xf32>
    %102 = arith.negf %101 : vector<2x128xf32>
    %103 = math.exp %102 : vector<2x128xf32>
    %cst_40 = arith.constant 1.000000e+00 : f32
    %104 = vector.broadcast %cst_40 : f32 to vector<2x128xf32>
    %105 = arith.addf %104, %103 : vector<2x128xf32>
    %106 = arith.divf %104, %105 : vector<2x128xf32>
    %107 = vector.extract_strided_slice %94 {offsets = [0, 256], sizes = [2, 128], strides = [1, 1]} : vector<2x512xf32> to vector<2x128xf32>
    %108 = math.tanh %107 : vector<2x128xf32>
    %109 = vector.extract_strided_slice %94 {offsets = [0, 384], sizes = [2, 128], strides = [1, 1]} : vector<2x512xf32> to vector<2x128xf32>
    %110 = arith.negf %109 : vector<2x128xf32>
    %111 = math.exp %110 : vector<2x128xf32>
    %cst_41 = arith.constant 1.000000e+00 : f32
    %112 = vector.broadcast %cst_41 : f32 to vector<2x128xf32>
    %113 = arith.addf %112, %111 : vector<2x128xf32>
    %114 = arith.divf %112, %113 : vector<2x128xf32>
    %115 = arith.mulf %106, %87 : vector<2x128xf32>
    %116 = arith.mulf %100, %108 : vector<2x128xf32>
    %117 = arith.addf %115, %116 : vector<2x128xf32>
    %118 = math.tanh %117 : vector<2x128xf32>
    %119 = arith.mulf %114, %118 : vector<2x128xf32>
    %c4_i32_42 = arith.constant 4 : i32
    %120 = arith.muli %arg0, %c4_i32_42 : i32
    %121 = arith.addi %120, %c2_i32 : i32
    %c8_i32_43 = arith.constant 8 : i32
    %122 = arith.cmpi slt, %121, %c8_i32_43 : i32
    %123 = arith.select %122, %119, %86 : vector<2x128xf32>
    %c0_44 = arith.constant 0 : index
    %c0_45 = arith.constant 0 : index
    %124 = vector.load %arg6[%c0_44, %c0_45] : memref<2x128xf32, #tpu.memory_space<vmem>>, vector<2x128xf32>
    tpu.vector_store %arg6[%c0_44, %c0_45], %123 {strides = array<i32>} : memref<2x128xf32, #tpu.memory_space<vmem>>, vector<2x128xf32>,
    %125 = arith.select %122, %117, %87 : vector<2x128xf32>
    %c0_46 = arith.constant 0 : index
    %c0_47 = arith.constant 0 : index
    %126 = vector.load %arg7[%c0_46, %c0_47] : memref<2x128xf32, #tpu.memory_space<vmem>>, vector<2x128xf32>
    tpu.vector_store %arg7[%c0_46, %c0_47], %125 {strides = array<i32>} : memref<2x128xf32, #tpu.memory_space<vmem>>, vector<2x128xf32>,
    %c3_i32 = arith.constant 3 : i32
    %c0_48 = arith.constant 0 : index
    %c0_49 = arith.constant 0 : index
    %127 = vector.load %arg6[%c0_48, %c0_49] : memref<2x128xf32, #tpu.memory_space<vmem>>, vector<2x128xf32>
    %c0_50 = arith.constant 0 : index
    %c0_51 = arith.constant 0 : index
    %128 = vector.load %arg7[%c0_50, %c0_51] : memref<2x128xf32, #tpu.memory_space<vmem>>, vector<2x128xf32>
    %129 = arith.index_cast %c3_i32 : i32 to index
    %c0_52 = arith.constant 0 : index
    %c0_53 = arith.constant 0 : index
    %130 = vector.load %arg1[%129, %c0_52, %c0_53] : memref<4x2x512xbf16, #tpu.memory_space<vmem>>, vector<1x2x512xbf16>
    %131 = vector.shape_cast %130 : vector<1x2x512xbf16> to vector<2x512xbf16>
    %132 = arith.extf %131 : vector<2x512xbf16> to vector<2x512xf32>
    %133 = arith.truncf %127 : vector<2x128xf32> to vector<2x128xbf16>
    %cst_54 = arith.constant dense<0.000000e+00> : vector<2x512xf32>
    %134 = tpu.matmul %133, %3, %cst_54 {dimension_numbers = #tpu.dot_dimension_numbers<[1], [0], [0], [1], [0, 0, 1, 1], [], []>} : vector<2x128xbf16>, vector<128x512xbf16>, vector<2x512xf32> -> vector<2x512xf32>
    %135 = arith.addf %132, %134 : vector<2x512xf32>
    %136 = vector.extract_strided_slice %135 {offsets = [0, 0], sizes = [2, 128], strides = [1, 1]} : vector<2x512xf32> to vector<2x128xf32>
    %137 = arith.negf %136 : vector<2x128xf32>
    %138 = math.exp %137 : vector<2x128xf32>
    %cst_55 = arith.constant 1.000000e+00 : f32
    %139 = vector.broadcast %cst_55 : f32 to vector<2x128xf32>
    %140 = arith.addf %139, %138 : vector<2x128xf32>
    %141 = arith.divf %139, %140 : vector<2x128xf32>
    %142 = vector.extract_strided_slice %135 {offsets = [0, 128], sizes = [2, 128], strides = [1, 1]} : vector<2x512xf32> to vector<2x128xf32>
    %143 = arith.negf %142 : vector<2x128xf32>
    %144 = math.exp %143 : vector<2x128xf32>
    %cst_56 = arith.constant 1.000000e+00 : f32
    %145 = vector.broadcast %cst_56 : f32 to vector<2x128xf32>
    %146 = arith.addf %145, %144 : vector<2x128xf32>
    %147 = arith.divf %145, %146 : vector<2x128xf32>
    %148 = vector.extract_strided_slice %135 {offsets = [0, 256], sizes = [2, 128], strides = [1, 1]} : vector<2x512xf32> to vector<2x128xf32>
    %149 = math.tanh %148 : vector<2x128xf32>
    %150 = vector.extract_strided_slice %135 {offsets = [0, 384], sizes = [2, 128], strides = [1, 1]} : vector<2x512xf32> to vector<2x128xf32>
    %151 = arith.negf %150 : vector<2x128xf32>
    %152 = math.exp %151 : vector<2x128xf32>
    %cst_57 = arith.constant 1.000000e+00 : f32
    %153 = vector.broadcast %cst_57 : f32 to vector<2x128xf32>
    %154 = arith.addf %153, %152 : vector<2x128xf32>
    %155 = arith.divf %153, %154 : vector<2x128xf32>
    %156 = arith.mulf %147, %128 : vector<2x128xf32>
    %157 = arith.mulf %141, %149 : vector<2x128xf32>
    %158 = arith.addf %156, %157 : vector<2x128xf32>
    %159 = math.tanh %158 : vector<2x128xf32>
    %160 = arith.mulf %155, %159 : vector<2x128xf32>
    %c4_i32_58 = arith.constant 4 : i32
    %161 = arith.muli %arg0, %c4_i32_58 : i32
    %162 = arith.addi %161, %c3_i32 : i32
    %c8_i32_59 = arith.constant 8 : i32
    %163 = arith.cmpi slt, %162, %c8_i32_59 : i32
    %164 = arith.select %163, %160, %127 : vector<2x128xf32>
    %c0_60 = arith.constant 0 : index
    %c0_61 = arith.constant 0 : index
    %165 = vector.load %arg6[%c0_60, %c0_61] : memref<2x128xf32, #tpu.memory_space<vmem>>, vector<2x128xf32>
    tpu.vector_store %arg6[%c0_60, %c0_61], %164 {strides = array<i32>} : memref<2x128xf32, #tpu.memory_space<vmem>>, vector<2x128xf32>,
    %166 = arith.select %163, %158, %128 : vector<2x128xf32>
    %c0_62 = arith.constant 0 : index
    %c0_63 = arith.constant 0 : index
    %167 = vector.load %arg7[%c0_62, %c0_63] : memref<2x128xf32, #tpu.memory_space<vmem>>, vector<2x128xf32>
    tpu.vector_store %arg7[%c0_62, %c0_63], %166 {strides = array<i32>} : memref<2x128xf32, #tpu.memory_space<vmem>>, vector<2x128xf32>,
    %c4_i32_64 = arith.constant 4 : i32
    %c1_i32_65 = arith.constant 1 : i32
    %168 = arith.cmpi eq, %arg0, %c1_i32_65 : i32
    %169 = arith.extui %168 : i1 to i32
    %c0_i32_66 = arith.constant 0 : i32
    %170 = arith.cmpi ne, %169, %c0_i32_66 : i32
    scf.if %170 {
      %c0_67 = arith.constant 0 : index
      %c0_68 = arith.constant 0 : index
      %171 = vector.load %arg6[%c0_67, %c0_68] : memref<2x128xf32, #tpu.memory_space<vmem>>, vector<2x128xf32>
      %172 = arith.truncf %171 : vector<2x128xf32> to vector<2x128xbf16>
      %c0_69 = arith.constant 0 : index
      %c0_70 = arith.constant 0 : index
      %173 = vector.load %arg3[%c0_69, %c0_70] : memref<128x128xbf16, #tpu.memory_space<vmem>>, vector<128x128xbf16>
      %cst_71 = arith.constant dense<0.000000e+00> : vector<2x128xf32>
      %174 = tpu.matmul %172, %173, %cst_71 {dimension_numbers = #tpu.dot_dimension_numbers<[1], [0], [0], [1], [0, 0, 1, 1], [], []>} : vector<2x128xbf16>, vector<128x128xbf16>, vector<2x128xf32> -> vector<2x128xf32>
      %c0_72 = arith.constant 0 : index
      %c0_73 = arith.constant 0 : index
      %175 = vector.load %arg4[%c0_72, %c0_73] : memref<1x128xf32, #tpu.memory_space<vmem>>, vector<1x128xf32>
      %176 = vector.broadcast %175 : vector<1x128xf32> to vector<2x128xf32>
      %177 = arith.addf %174, %176 : vector<2x128xf32>
      %c0_74 = arith.constant 0 : index
      %c0_75 = arith.constant 0 : index
      %178 = vector.load %arg5[%c0_74, %c0_75] : memref<2x128xf32, #tpu.memory_space<vmem>>, vector<2x128xf32>
      tpu.vector_store %arg5[%c0_74, %c0_75], %177 {strides = array<i32>} : memref<2x128xf32, #tpu.memory_space<vmem>>, vector<2x128xf32>,
    } else {
    }
    return
  }
  func.func @transform_0(%arg0: i32) -> (i32, i32, i32) {
    %c0_i32 = arith.constant 0 : i32
    %c0_i32_0 = arith.constant 0 : i32
    %c0_i32_1 = arith.constant 0 : i32
    return %arg0, %c0_i32, %c0_i32_0 : i32, i32, i32
  }
  func.func @transform_1(%arg0: i32) -> (i32, i32) {
    %c0_i32 = arith.constant 0 : i32
    %c0_i32_0 = arith.constant 0 : i32
    %c0_i32_1 = arith.constant 0 : i32
    return %c0_i32, %c0_i32_0 : i32, i32
  }
  func.func @transform_2(%arg0: i32) -> (i32, i32) {
    %c0_i32 = arith.constant 0 : i32
    %c0_i32_0 = arith.constant 0 : i32
    %c0_i32_1 = arith.constant 0 : i32
    return %c0_i32, %c0_i32_0 : i32, i32
  }
  func.func @transform_3(%arg0: i32) -> (i32, i32) {
    %c0_i32 = arith.constant 0 : i32
    %c0_i32_0 = arith.constant 0 : i32
    %c0_i32_1 = arith.constant 0 : i32
    return %c0_i32, %c0_i32_0 : i32, i32
  }
  func.func @transform_4(%arg0: i32) -> (i32, i32) {
    %c0_i32 = arith.constant 0 : i32
    %c0_i32_0 = arith.constant 0 : i32
    %c0_i32_1 = arith.constant 0 : i32
    return %c0_i32, %c0_i32_0 : i32, i32
  }
}

</mosaic_0001>

<llo_original>
// kernel: video_lstm_forward.2
$region0: #{video_lstm_forward.2}
  #allocation0 [shape = 'u32[]', space=smem, size = 0x4, offset = 0x4, fixed_abs, tag = 'smem constant byte address 0x4 - core index']
  #allocation1 [shape = 'u32[144,128]{1,0:T(1,128)}', space=vmem, size = 0x12000, scoped, tag = 'internal scratch']
  %s0 = inlined_call_operand.vmem [shape: bf16[16,192], index: 0, kind: input, shape index: {}]
  %s1 = inlined_call_operand.vmem [shape: bf16[192,64], index: 1, kind: input, shape index: {}]
  %s2 = inlined_call_operand.vmem [shape: f32[1,64], index: 2, kind: input, shape index: {}, may-alias: {2,4}]
  %s3 = inlined_call_operand.vmem [shape: f32[1,64], index: 3, kind: input, shape index: {}]
  %s4 = inlined_call_operand.vmem [shape: f32[1,64], index: 4, kind: input, shape index: {}, may-alias: {2,4}]
  %s5 = inlined_call_operand.vmem [shape: bf16[64,512], index: 5, kind: input, shape index: {}]
  %s6 = inlined_call_operand.vmem [shape: f32[1,512], index: 6, kind: input, shape index: {}]
  %s7 = inlined_call_operand.vmem [shape: bf16[16,512], index: 7, kind: output, shape index: {}]
  %s8 = sld [smem:[#allocation0]]
  $region61: #{video_lstm_forward.2} parent=0
    _
  %s10 = ssub.s32 1, %s8
  %s11 = scalar_select 0, %s10, %s8
  loop: start=0, step=1, limit=4
  $region2: #{video_lstm_forward.2} parent=0 // loop_pre_header
    _
  $region3: #{video_lstm_forward.2} parent=0 // loop_header
    %s13 = sphi 0, %s17
    %p14 = scmp.ge.s32.totalorder %s13, 4
    %s23 = sphi 0, %s25
    %s26 = sphi 0, %s23
    %s27 = sphi 0, %s26
    %s43 = sphi 0, %s27
    %s47 = sphi 0, %s47
    %s49 = sphi 0, %s47
    %s50 = sphi 0, %s49
    %s64 = sphi 0, %s50
    %s68 = sphi 0, %s68
    %s70 = sphi 0, %s68
    %s71 = sphi 0, %s70
    %s85 = sphi 0, %s71
    %s89 = sphi 0, %s89
    %s91 = sphi 0, %s89
    %s92 = sphi 0, %s91
    %s106 = sphi 0, %s92
    %s110 = sphi 0, %s110
    %s112 = sphi 0, %s110
    %s113 = sphi 0, %s112
    %s127 = sphi 0, %s113
    %s131 = sphi 0, %s131
    %s133 = sphi 0, %s131
    %s134 = sphi 0, %s133
    %s148 = sphi 0, %s134
    %s152 = sphi 0, %s152
    %s154 = sphi 0, %s152
    %s155 = sphi 0, %s154
    %s169 = sphi 0, %s155
    %s175 = sphi 0, %s177
    %s178 = sphi 0, %s175
    %s179 = sphi 0, %s178
    %s195 = sphi 0, %s179
  $region4: #{video_lstm_forward.2} parent=0 // loop_header_branch
    %16 = sbr.rel (%p14) target = $region8
  $region5: #{video_lstm_forward.2} parent=0 // loop_body
    %s18 = ssub.s32 %s13, 1
    %s19 = ssub.s32 %s13, 2
    %s20 = sadd.s32 %s13, 1
    %s21 = ssub.s32 %s13, %s20
    %p22 = scmp.eq.s32.totalorder %s21, 0
    %s24 = sadd.s32 %s23, 1
    %s25 = scalar_select %p22, %s23, %s24
    %p28 = pneg %p22
    %p29 = scmp.eq.s32.totalorder %s13, 1
    %p30 = por %p28, %p29
    %p31 = scmp.ne.s32.totalorder %s23, %s26
    %p32 = scmp.eq.s32.totalorder %s13, 0
    %p33 = por %p31, %p32
    %p34 = scmp.ne.s32.totalorder %s23, %s26
    %p35 = scmp.eq.s32.totalorder %s18, 1
    %p36 = por %p34, %p35
    %p37 = scmp.ne.s32.totalorder %s26, %s27
    %p38 = scmp.eq.s32.totalorder %s18, 0
    %p39 = por %p37, %p38
    %p40 = scmp.ne.s32.totalorder %s26, %s27
    %p41 = scmp.eq.s32.totalorder %s19, 1
    %p42 = por %p40, %p41
    %p44 = scmp.ne.s32.totalorder %s27, %s43
    %p45 = scmp.eq.s32.totalorder %s19, 0
    %p46 = por %p44, %p45
    %s48 = sadd.s32 %s47, 1
    %p51 = scmp.eq.s32.totalorder %s13, 1
    %p52 = scmp.ne.s32.totalorder %s47, %s49
    %p53 = scmp.eq.s32.totalorder %s13, 0
    %p54 = por %p52, %p53
    %p55 = scmp.ne.s32.totalorder %s47, %s49
    %p56 = scmp.eq.s32.totalorder %s18, 1
    %p57 = por %p55, %p56
    %p58 = scmp.ne.s32.totalorder %s49, %s50
    %p59 = scmp.eq.s32.totalorder %s18, 0
    %p60 = por %p58, %p59
    %p61 = scmp.ne.s32.totalorder %s49, %s50
    %p62 = scmp.eq.s32.totalorder %s19, 1
    %p63 = por %p61, %p62
    %p65 = scmp.ne.s32.totalorder %s50, %s64
    %p66 = scmp.eq.s32.totalorder %s19, 0
    %p67 = por %p65, %p66
    %s69 = sadd.s32 %s68, 1
    %p72 = scmp.eq.s32.totalorder %s13, 1
    %p73 = scmp.ne.s32.totalorder %s68, %s70
    %p74 = scmp.eq.s32.totalorder %s13, 0
    %p75 = por %p73, %p74
    %p76 = scmp.ne.s32.totalorder %s68, %s70
    %p77 = scmp.eq.s32.totalorder %s18, 1
    %p78 = por %p76, %p77
    %p79 = scmp.ne.s32.totalorder %s70, %s71
    %p80 = scmp.eq.s32.totalorder %s18, 0
    %p81 = por %p79, %p80
    %p82 = scmp.ne.s32.totalorder %s70, %s71
    %p83 = scmp.eq.s32.totalorder %s19, 1
    %p84 = por %p82, %p83
    %p86 = scmp.ne.s32.totalorder %s71, %s85
    %p87 = scmp.eq.s32.totalorder %s19, 0
    %p88 = por %p86, %p87
    %s90 = sadd.s32 %s89, 1
    %p93 = scmp.eq.s32.totalorder %s13, 1
    %p94 = scmp.ne.s32.totalorder %s89, %s91
    %p95 = scmp.eq.s32.totalorder %s13, 0
    %p96 = por %p94, %p95
    %p97 = scmp.ne.s32.totalorder %s89, %s91
    %p98 = scmp.eq.s32.totalorder %s18, 1
    %p99 = por %p97, %p98
    %p100 = scmp.ne.s32.totalorder %s91, %s92
    %p101 = scmp.eq.s32.totalorder %s18, 0
    %p102 = por %p100, %p101
    %p103 = scmp.ne.s32.totalorder %s91, %s92
    %p104 = scmp.eq.s32.totalorder %s19, 1
    %p105 = por %p103, %p104
    %p107 = scmp.ne.s32.totalorder %s92, %s106
    %p108 = scmp.eq.s32.totalorder %s19, 0
    %p109 = por %p107, %p108
    %s111 = sadd.s32 %s110, 1
    %p114 = scmp.eq.s32.totalorder %s13, 1
    %p115 = scmp.ne.s32.totalorder %s110, %s112
    %p116 = scmp.eq.s32.totalorder %s13, 0
    %p117 = por %p115, %p116
    %p118 = scmp.ne.s32.totalorder %s110, %s112
    %p119 = scmp.eq.s32.totalorder %s18, 1
    %p120 = por %p118, %p119
    %p121 = scmp.ne.s32.totalorder %s112, %s113
    %p122 = scmp.eq.s32.totalorder %s18, 0
    %p123 = por %p121, %p122
    %p124 = scmp.ne.s32.totalorder %s112, %s113
    %p125 = scmp.eq.s32.totalorder %s19, 1
    %p126 = por %p124, %p125
    %p128 = scmp.ne.s32.totalorder %s113, %s127
    %p129 = scmp.eq.s32.totalorder %s19, 0
    %p130 = por %p128, %p129
    %s132 = sadd.s32 %s131, 1
    %p135 = scmp.eq.s32.totalorder %s13, 1
    %p136 = scmp.ne.s32.totalorder %s131, %s133
    %p137 = scmp.eq.s32.totalorder %s13, 0
    %p138 = por %p136, %p137
    %p139 = scmp.ne.s32.totalorder %s131, %s133
    %p140 = scmp.eq.s32.totalorder %s18, 1
    %p141 = por %p139, %p140
    %p142 = scmp.ne.s32.totalorder %s133, %s134
    %p143 = scmp.eq.s32.totalorder %s18, 0
    %p144 = por %p142, %p143
    %p145 = scmp.ne.s32.totalorder %s133, %s134
    %p146 = scmp.eq.s32.totalorder %s19, 1
    %p147 = por %p145, %p146
    %p149 = scmp.ne.s32.totalorder %s134, %s148
    %p150 = scmp.eq.s32.totalorder %s19, 0
    %p151 = por %p149, %p150
    %s153 = sadd.s32 %s152, 1
    %p156 = scmp.eq.s32.totalorder %s13, 1
    %p157 = scmp.ne.s32.totalorder %s152, %s154
    %p158 = scmp.eq.s32.totalorder %s13, 0
    %p159 = por %p157, %p158
    %p160 = scmp.ne.s32.totalorder %s152, %s154
    %p161 = scmp.eq.s32.totalorder %s18, 1
    %p162 = por %p160, %p161
    %p163 = scmp.ne.s32.totalorder %s154, %s155
    %p164 = scmp.eq.s32.totalorder %s18, 0
    %p165 = por %p163, %p164
    %p166 = scmp.ne.s32.totalorder %s154, %s155
    %p167 = scmp.eq.s32.totalorder %s19, 1
    %p168 = por %p166, %p167
    %p170 = scmp.ne.s32.totalorder %s155, %s169
    %p171 = scmp.eq.s32.totalorder %s19, 0
    %p172 = por %p170, %p171
    %s173 = ssub.s32 %s13, %s20
    %p174 = scmp.eq.s32.totalorder %s173, 0
    %s176 = sadd.s32 %s175, 1
    %s177 = scalar_select %p174, %s175, %s176
    %p180 = pneg %p174
    %p181 = scmp.eq.s32.totalorder %s13, 1
    %p182 = por %p180, %p181
    %p183 = scmp.ne.s32.totalorder %s175, %s178
    %p184 = scmp.eq.s32.totalorder %s13, 0
    %p185 = por %p183, %p184
    %p186 = scmp.ne.s32.totalorder %s175, %s178
    %p187 = scmp.eq.s32.totalorder %s18, 1
    %p188 = por %p186, %p187
    %p189 = scmp.ne.s32.totalorder %s178, %s179
    %p190 = scmp.eq.s32.totalorder %s18, 0
    %p191 = por %p189, %p190
    %p192 = scmp.ne.s32.totalorder %s178, %s179
    %p193 = scmp.eq.s32.totalorder %s19, 1
    %p194 = por %p192, %p193
    %p196 = scmp.ne.s32.totalorder %s179, %s195
    %p197 = scmp.eq.s32.totalorder %s19, 0
    %p198 = por %p196, %p197
    %p199 = scmp.le.s32.totalorder 1, %s13
    %p200 = scmp.lt.s32.totalorder %s13, 3
    %p201 = pnand %p199, %p200
    %p202 = pneg %p201
    // Predicated region
    $region9: #{video_lstm_forward.2} parent=5 // pred_check
      _
    $region10: #{video_lstm_forward.2} parent=5 // pred_check_branch
      %204 = sbr.rel (%p201) target = $region12
    $region11: #{video_lstm_forward.2} parent=5 // pred_region
      %s205 = ssub.s32 %s13, 1
      // Predicated region
      $region13: #{video_lstm_forward.2} parent=11 // pred_check
        %p206 = pneg %p60
      $region14: #{video_lstm_forward.2} parent=11 // pred_check_branch
        %208 = sbr.rel (%p206) target = $region16
      $region15: #{video_lstm_forward.2} parent=11 // pred_region
        _
      $region16: #{video_lstm_forward.2} parent=11 // pred_fallthru
        _
      // Predicated region
      $region17: #{video_lstm_forward.2} parent=11 // pred_check
        %p209 = pneg %p81
      $region18: #{video_lstm_forward.2} parent=11 // pred_check_branch
        %211 = sbr.rel (%p209) target = $region20
      $region19: #{video_lstm_forward.2} parent=11 // pred_region
        _
      $region20: #{video_lstm_forward.2} parent=11 // pred_fallthru
        _
      // Predicated region
      $region21: #{video_lstm_forward.2} parent=11 // pred_check
        %p212 = pneg %p102
      $region22: #{video_lstm_forward.2} parent=11 // pred_check_branch
        %214 = sbr.rel (%p212) target = $region24
      $region23: #{video_lstm_forward.2} parent=11 // pred_region
        _
      $region24: #{video_lstm_forward.2} parent=11 // pred_fallthru
        _
      // Predicated region
      $region25: #{video_lstm_forward.2} parent=11 // pred_check
        %p215 = pneg %p123
      $region26: #{video_lstm_forward.2} parent=11 // pred_check_branch
        %217 = sbr.rel (%p215) target = $region28
      $region27: #{video_lstm_forward.2} parent=11 // pred_region
        _
      $region28: #{video_lstm_forward.2} parent=11 // pred_fallthru
        _
      // Predicated region
      $region29: #{video_lstm_forward.2} parent=11 // pred_check
        %p218 = pneg %p144
      $region30: #{video_lstm_forward.2} parent=11 // pred_check_branch
        %220 = sbr.rel (%p218) target = $region32
      $region31: #{video_lstm_forward.2} parent=11 // pred_region
        _
      $region32: #{video_lstm_forward.2} parent=11 // pred_fallthru
        _
      // Predicated region
      $region33: #{video_lstm_forward.2} parent=11 // pred_check
        %p221 = pneg %p165
      $region34: #{video_lstm_forward.2} parent=11 // pred_check_branch
        %223 = sbr.rel (%p221) target = $region36
      $region35: #{video_lstm_forward.2} parent=11 // pred_region
        _
      $region36: #{video_lstm_forward.2} parent=11 // pred_fallthru
        _
    $region12: #{video_lstm_forward.2} parent=5 // pred_fallthru
      _
    %p224 = scmp.lt.s32.totalorder %s13, 2
    // Predicated region
    $region37: #{video_lstm_forward.2} parent=5 // pred_check
      %p225 = pneg %p224
    $region38: #{video_lstm_forward.2} parent=5 // pred_check_branch
      %227 = sbr.rel (%p225) target = $region40
    $region39: #{video_lstm_forward.2} parent=5 // pred_region
      // Predicated region
      $region41: #{video_lstm_forward.2} parent=39 // pred_check
        %p228 = pneg %p33
      $region42: #{video_lstm_forward.2} parent=39 // pred_check_branch
        %230 = sbr.rel (%p228) target = $region44
      $region43: #{video_lstm_forward.2} parent=39 // pred_region
        %p231 = scmp.lt.s32.totalorder %s13, 1
        %s232 = scalar_select %p231, %s13, 1
        %s233 = smul.addr %s232, 2
        %s234 = smul.addr %s233, 4
        %s235 = scalar_lea.vmem %s0, %s234
      $region44: #{video_lstm_forward.2} parent=39 // pred_fallthru
        _
    $region40: #{video_lstm_forward.2} parent=5 // pred_fallthru
      _
    %p236 = scmp.le.s32.totalorder 1, %s13
    %p237 = scmp.lt.s32.totalorder %s13, 3
    %p238 = pnand %p236, %p237
    %p239 = pneg %p238
    // Predicated region
    $region45: #{video_lstm_forward.2} parent=5 // pred_check
      _
    $region46: #{video_lstm_forward.2} parent=5 // pred_check_branch
      %241 = sbr.rel (%p238) target = $region48
    $region47: #{video_lstm_forward.2} parent=5 // pred_region
      %s242 = ssub.s32 %s13, 1
      %p243 = scmp.lt.s32.totalorder %s18, 1
      %s244 = scalar_select %p243, %s18, 1
      %s245 = smul.addr %s244, 2
      %s246 = smul.addr %s245, 4
      %s247 = scalar_lea.vmem %s0, %s246
      %p248 = pneg %p39
      %p249 = pneg %p36
      %p250 = pneg %p60
      %p251 = pneg %p57
      %p252 = pneg %p81
      %p253 = pneg %p78
      %p254 = pneg %p102
      %p255 = pneg %p99
      %p256 = pneg %p123
      %p257 = pneg %p120
      %p258 = pneg %p144
      %p259 = pneg %p141
      %p260 = pneg %p165
      %p261 = pneg %p162
      %p262 = pneg %p191
      %p263 = pneg %p188
      %p264 = scmp.lt.s32.totalorder %s18, 1
      %s265 = scalar_select %p264, %s18, 1
      %s266 = smul.addr %s265, 4
      %s267 = smul.addr %s266, 4
      %s268 = scalar_lea.vmem %s7, %s267
      %p269 = scmp.lt.s32.totalorder %s18, 1
      %s270 = scalar_select %p269, %s18, 1
      %s271 = smul.addr %s270, 2
      %s272 = smul.addr %s271, 4
      %s273 = scalar_lea.vmem %s0, %s272
      %p274 = scmp.lt.s32.totalorder %s18, 1
      %s275 = scalar_select %p274, %s18, 1
      %s276 = smul.addr %s275, 4
      %s277 = smul.addr %s276, 4
      %s278 = scalar_lea.vmem %s7, %s277
      %v280 = vld [vmem:[%s273] sm:$0xff]
      %v281 = vld [vmem:[%s1] sm:$0xf]
      %v282 = vld [vmem:[%s1 + $0x4] sm:$0xf]
      %v283 = vld [vmem:[%s1 + $0x8] sm:$0xf]
      %v284 = vld [vmem:[%s1 + $0xc] sm:$0xf]
      %v285 = vld [vmem:[%s1 + $0x10] sm:$0xf]
      %v286 = vld [vmem:[%s1 + $0x14] sm:$0xf]
      %v287 = vld [vmem:[%s1 + $0x18] sm:$0xf]
      %v288 = vld [vmem:[%s1 + $0x1c] sm:$0xf]
      %v289 = vld [vmem:[%s1 + $0x20] sm:$0xf]
      %v290 = vld [vmem:[%s1 + $0x24] sm:$0xf]
      %v291 = vld [vmem:[%s1 + $0x28] sm:$0xf]
      %v292 = vld [vmem:[%s1 + $0x2c] sm:$0xf]
      %v293 = vld [vmem:[%s1 + $0x30] sm:$0xf]
      %v294 = vld [vmem:[%s1 + $0x34] sm:$0xf]
      %v295 = vld [vmem:[%s1 + $0x38] sm:$0xf]
      %v296 = vld [vmem:[%s1 + $0x3c] sm:$0xf]
      %v297 = vld [vmem:[%s1 + $0x40] sm:$0xf]
      %v298 = vld [vmem:[%s1 + $0x44] sm:$0xf]
      %v299 = vld [vmem:[%s1 + $0x48] sm:$0xf]
      %v300 = vld [vmem:[%s1 + $0x4c] sm:$0xf]
      %v301 = vld [vmem:[%s1 + $0x50] sm:$0xf]
      %v302 = vld [vmem:[%s1 + $0x54] sm:$0xf]
      %v303 = vld [vmem:[%s1 + $0x58] sm:$0xf]
      %v304 = vld [vmem:[%s1 + $0x5c] sm:$0xf]
      %v305 = vld [vmem:[%s2] sm:$0x1]
      %v307 = vlaneseq
      %v308 = vshrl.u32 %v307, 7
      %v309 = vsub.s32 0, %v308
      %v310 = vrot.slane %v305, %v309
      %v313 = vunpack.c.l.b16 %v280
      %v314 = vunpack.c.h.b16 %v280
      %v315 = vpack.c.b16 %v313, %v313
      %v316 = vpack.c.b16 %v314, %v314
      %v342 = vunpack.c.l.b16 %v281
      %v343 = vunpack.c.l.b16 %v282
      %v344 = vunpack.c.l.b16 %v283
      %v345 = vunpack.c.l.b16 %v284
      %v346 = vunpack.c.l.b16 %v285
      %v347 = vunpack.c.l.b16 %v286
      %v348 = vunpack.c.l.b16 %v287
      %v349 = vunpack.c.l.b16 %v288
      %v350 = vunpack.c.l.b16 %v289
      %v351 = vunpack.c.l.b16 %v290
      %v352 = vunpack.c.l.b16 %v291
      %v353 = vunpack.c.l.b16 %v292
      %v354 = vunpack.c.l.b16 %v293
      %v355 = vunpack.c.l.b16 %v294
      %v356 = vunpack.c.l.b16 %v295
      %v357 = vunpack.c.l.b16 %v296
      %v358 = vunpack.c.l.b16 %v297
      %v359 = vunpack.c.l.b16 %v298
      %v360 = vunpack.c.l.b16 %v299
      %v361 = vunpack.c.l.b16 %v300
      %v362 = vunpack.c.l.b16 %v301
      %v363 = vunpack.c.l.b16 %v302
      %v364 = vunpack.c.l.b16 %v303
      %v365 = vunpack.c.l.b16 %v304
      %v366 = vpack.c.b16 %v343, %v342
      %v367 = vpack.c.b16 %v345, %v344
      %v368 = vpack.c.b16 %v347, %v346
      %v369 = vpack.c.b16 %v349, %v348
      %v370 = vpack.c.b16 %v351, %v350
      %v371 = vpack.c.b16 %v353, %v352
      %v372 = vpack.c.b16 %v355, %v354
      %v373 = vpack.c.b16 %v357, %v356
      %v374 = vpack.c.b16 %v359, %v358
      %v375 = vpack.c.b16 %v361, %v360
      %v376 = vpack.c.b16 %v363, %v362
      %v377 = vpack.c.b16 %v365, %v364
      %vm390 = vcmask 523264
      %v392 = vsel %vm390, %v316, 0
      %394 = vmatprep.subr.bf16.mxu0 0
      %395 = vmatpush1.bf16.msra.mxu0 %v373
      %396 = vmatprep.subr.bf16.mxu0 0
      %397 = vmatpush1.bf16.msra.mxu0 %v372
      %398 = vmatprep.subr.bf16.mxu0 0
      %399 = vmatpush1.bf16.msra.mxu0 %v371
      %400 = vmatprep.subr.bf16.mxu0 0
      %401 = vmatpush1.bf16.msra.mxu0 %v370
      %402 = vmatprep.subr.bf16.mxu0 0
      %403 = vmatpush1.bf16.msra.mxu0 %v369
      %404 = vmatprep.subr.bf16.mxu0 0
      %405 = vmatpush1.bf16.msra.mxu0 %v368
      %406 = vmatprep.subr.bf16.mxu0 0
      %407 = vmatpush1.bf16.msra.mxu0 %v367
      %408 = vmatprep.subr.bf16.mxu0 0
      %409 = vmatpush1.bf16.msra.mxu0 %v366
      %410 = vmatprep.subr.bf16.mxu0 0
      %411 = vmatpush2.bf16.msra.mxu0 0
      %412 = vmatprep.subr.bf16.mxu0 0
      %413 = vmatpush2.bf16.msra.mxu0 0
      %414 = vmatprep.subr.bf16.mxu0 0
      %415 = vmatpush2.bf16.msra.mxu0 0
      %416 = vmatprep.subr.bf16.mxu0 0
      %417 = vmatpush2.bf16.msra.mxu0 0
      %418 = vmatprep.subr.bf16.mxu0 0
      %419 = vmatpush2.bf16.msra.mxu0 %v377
      %420 = vmatprep.subr.bf16.mxu0 0
      %421 = vmatpush2.bf16.msra.mxu0 %v376
      %422 = vmatprep.subr.bf16.mxu0 0
      %423 = vmatpush2.bf16.msra.mxu0 %v375
      %424 = vmatprep.subr.bf16.mxu0 0
      %425 = vmatpush2.bf16.msra.mxu0 %v374
      %426 = vmatprep.mubr.bf16.mxu0 %v392
      %427 = vmatmul.mubr.bf16.gmra.mxu0 %v315
      %v428 = vpop.f32.mrf.mxu0
      %v429 = vadd.f32 %v310, %v428
      %v430 = vpop.f32.mrf.mxu0
      %v431 = vpop.f32.mrf.mxu0
      %v432 = vpop.f32.mrf.mxu0
      %433 = vdwg.mxu0
      %v434 = vsel %vm390, %v429, 0.0
      %435 = vadd.xlane.f32.xlu0 %v434
      %v436 = vpop.xlane.xlu0 %435
      %v437 = vrcp.pop 64.0
      %v438 = vmul.f32 %v436, %v437
      %v439 = vsub.f32 %v429, %v438
      %v440 = vmul.f32 %v439, %v439
      %v441 = vsel %vm390, %v440, 0.0
      %442 = vadd.xlane.f32.xlu0 %v441
      %v443 = vpop.xlane.xlu0 %442
      %v444 = vmul.f32 %v443, %v437
      %v445 = vadd.f32 %v444, 1e-06
      %v446 = vrsqrt.pop %v445
      %v447 = vmul.f32 %v439, %v446
      %v448 = vld [vmem:[%s3] sm:$0x1]
      %v450 = vlaneseq
      %v451 = vshrl.u32 %v450, 7
      %v452 = vsub.s32 0, %v451
      %v453 = vrot.slane %v448, %v452
      %v455 = vmul.f32 %v447, %v453
      %v456 = vld [vmem:[%s4] sm:$0x1]
      %v458 = vlaneseq
      %v459 = vshrl.u32 %v458, 7
      %v460 = vsub.s32 0, %v459
      %v461 = vrot.slane %v456, %v460
      %v463 = vadd.f32 %v455, %v461
      %v464 = vpack.c.bf16 %v463, %v463
      %v465 = vld [vmem:[%s5] sm:$0xff]
      %v466 = vld [vmem:[%s5 + $0x8] sm:$0xff]
      %v467 = vld [vmem:[%s5 + $0x10] sm:$0xff]
      %v468 = vld [vmem:[%s5 + $0x18] sm:$0xff]
      %v469 = vld [vmem:[%s5 + $0x20] sm:$0xff]
      %v470 = vld [vmem:[%s5 + $0x28] sm:$0xff]
      %v471 = vld [vmem:[%s5 + $0x30] sm:$0xff]
      %v472 = vld [vmem:[%s5 + $0x38] sm:$0xff]
      %v473 = vld [vmem:[%s5 + $0x40] sm:$0xff]
      %v474 = vld [vmem:[%s5 + $0x48] sm:$0xff]
      %v475 = vld [vmem:[%s5 + $0x50] sm:$0xff]
      %v476 = vld [vmem:[%s5 + $0x58] sm:$0xff]
      %v477 = vld [vmem:[%s5 + $0x60] sm:$0xff]
      %v478 = vld [vmem:[%s5 + $0x68] sm:$0xff]
      %v479 = vld [vmem:[%s5 + $0x70] sm:$0xff]
      %v480 = vld [vmem:[%s5 + $0x78] sm:$0xff]
      %v481 = vld [vmem:[%s6] sm:$0xf]
      %v483 = vlaneseq
      %v484 = vshrl.u32 %v483, 7
      %v485 = vsub.s32 0, %v484
      %v486 = vrot.slane %v481, %v485
      %v487 = vlaneseq
      %v488 = vshrl.u32 %v487, 7
      %v489 = vsub.s32 1, %v488
      %v490 = vrot.slane %v481, %v489
      %v491 = vlaneseq
      %v492 = vshrl.u32 %v491, 7
      %v493 = vsub.s32 2, %v492
      %v494 = vrot.slane %v481, %v493
      %v495 = vlaneseq
      %v496 = vshrl.u32 %v495, 7
      %v497 = vsub.s32 3, %v496
      %v498 = vrot.slane %v481, %v497
      %v519 = vunpack.c.l.b16 %v465
      %v520 = vunpack.c.h.b16 %v465
      %v521 = vunpack.c.l.b16 %v466
      %v522 = vunpack.c.h.b16 %v466
      %v523 = vunpack.c.l.b16 %v467
      %v524 = vunpack.c.h.b16 %v467
      %v525 = vunpack.c.l.b16 %v468
      %v526 = vunpack.c.h.b16 %v468
      %v527 = vunpack.c.l.b16 %v469
      %v528 = vunpack.c.h.b16 %v469
      %v529 = vunpack.c.l.b16 %v470
      %v530 = vunpack.c.h.b16 %v470
      %v531 = vunpack.c.l.b16 %v471
      %v532 = vunpack.c.h.b16 %v471
      %v533 = vunpack.c.l.b16 %v472
      %v534 = vunpack.c.h.b16 %v472
      %v535 = vunpack.c.l.b16 %v473
      %v536 = vunpack.c.h.b16 %v473
      %v537 = vunpack.c.l.b16 %v474
      %v538 = vunpack.c.h.b16 %v474
      %v539 = vunpack.c.l.b16 %v475
      %v540 = vunpack.c.h.b16 %v475
      %v541 = vunpack.c.l.b16 %v476
      %v542 = vunpack.c.h.b16 %v476
      %v543 = vunpack.c.l.b16 %v477
      %v544 = vunpack.c.h.b16 %v477
      %v545 = vunpack.c.l.b16 %v478
      %v546 = vunpack.c.h.b16 %v478
      %v547 = vunpack.c.l.b16 %v479
      %v548 = vunpack.c.h.b16 %v479
      %v549 = vunpack.c.l.b16 %v480
      %v550 = vunpack.c.h.b16 %v480
      %v551 = vpack.c.b16 %v523, %v519
      %v552 = vpack.c.b16 %v524, %v520
      %v553 = vpack.c.b16 %v525, %v521
      %v554 = vpack.c.b16 %v526, %v522
      %v555 = vpack.c.b16 %v531, %v527
      %v556 = vpack.c.b16 %v532, %v528
      %v557 = vpack.c.b16 %v533, %v529
      %v558 = vpack.c.b16 %v534, %v530
      %v559 = vpack.c.b16 %v539, %v535
      %v560 = vpack.c.b16 %v540, %v536
      %v561 = vpack.c.b16 %v541, %v537
      %v562 = vpack.c.b16 %v542, %v538
      %v563 = vpack.c.b16 %v547, %v543
      %v564 = vpack.c.b16 %v548, %v544
      %v565 = vpack.c.b16 %v549, %v545
      %v566 = vpack.c.b16 %v550, %v546
      %v584 = vsel %vm390, %v464, 0
      %586 = vmatprep.subr.bf16.mxu0 0
      %587 = vmatpush1.bf16.msra.mxu0 0
      %588 = vmatprep.subr.bf16.mxu0 0
      %589 = vmatpush1.bf16.msra.mxu0 0
      %590 = vmatprep.subr.bf16.mxu0 0
      %591 = vmatpush1.bf16.msra.mxu0 0
      %592 = vmatprep.subr.bf16.mxu0 0
      %593 = vmatpush1.bf16.msra.mxu0 0
      %594 = vmatprep.subr.bf16.mxu0 %v564
      %595 = vmatpush1.bf16.msra.mxu0 %v563
      %596 = vmatprep.subr.bf16.mxu0 %v560
      %597 = vmatpush1.bf16.msra.mxu0 %v559
      %598 = vmatprep.subr.bf16.mxu0 %v556
      %599 = vmatpush1.bf16.msra.mxu0 %v555
      %600 = vmatprep.subr.bf16.mxu0 %v552
      %601 = vmatpush1.bf16.msra.mxu0 %v551
      %602 = vmatprep.subr.bf16.mxu0 0
      %603 = vmatpush2.bf16.msra.mxu0 0
      %604 = vmatprep.subr.bf16.mxu0 0
      %605 = vmatpush2.bf16.msra.mxu0 0
      %606 = vmatprep.subr.bf16.mxu0 0
      %607 = vmatpush2.bf16.msra.mxu0 0
      %608 = vmatprep.subr.bf16.mxu0 0
      %609 = vmatpush2.bf16.msra.mxu0 0
      %610 = vmatprep.subr.bf16.mxu0 0
      %611 = vmatpush2.bf16.msra.mxu0 0
      %612 = vmatprep.subr.bf16.mxu0 0
      %613 = vmatpush2.bf16.msra.mxu0 0
      %614 = vmatprep.subr.bf16.mxu0 0
      %615 = vmatpush2.bf16.msra.mxu0 0
      %616 = vmatprep.subr.bf16.mxu0 0
      %617 = vmatpush2.bf16.msra.mxu0 0
      %618 = vmatprep.mubr.bf16.mxu0 0
      %619 = vmatmul.mubr.bf16.gmra.mxu0 %v584
      %v620 = vpop.f32.mrf.mxu0
      %v621 = vadd.f32 %v486, %v620
      %v622 = vpop.f32.mrf.mxu0
      %v623 = vadd.f32 %v490, %v622
      %v624 = vpop.f32.mrf.mxu0
      %v625 = vpop.f32.mrf.mxu0
      %626 = vdwg.mxu0
      %627 = vmatprep.subr.bf16.mxu0 0
      %628 = vmatpush1.bf16.msra.mxu0 0
      %629 = vmatprep.subr.bf16.mxu0 0
      %630 = vmatpush1.bf16.msra.mxu0 0
      %631 = vmatprep.subr.bf16.mxu0 0
      %632 = vmatpush1.bf16.msra.mxu0 0
      %633 = vmatprep.subr.bf16.mxu0 0
      %634 = vmatpush1.bf16.msra.mxu0 0
      %635 = vmatprep.subr.bf16.mxu0 %v566
      %636 = vmatpush1.bf16.msra.mxu0 %v565
      %637 = vmatprep.subr.bf16.mxu0 %v562
      %638 = vmatpush1.bf16.msra.mxu0 %v561
      %639 = vmatprep.subr.bf16.mxu0 %v558
      %640 = vmatpush1.bf16.msra.mxu0 %v557
      %641 = vmatprep.subr.bf16.mxu0 %v554
      %642 = vmatpush1.bf16.msra.mxu0 %v553
      %643 = vmatprep.subr.bf16.mxu0 0
      %644 = vmatpush2.bf16.msra.mxu0 0
      %645 = vmatprep.subr.bf16.mxu0 0
      %646 = vmatpush2.bf16.msra.mxu0 0
      %647 = vmatprep.subr.bf16.mxu0 0
      %648 = vmatpush2.bf16.msra.mxu0 0
      %649 = vmatprep.subr.bf16.mxu0 0
      %650 = vmatpush2.bf16.msra.mxu0 0
      %651 = vmatprep.subr.bf16.mxu0 0
      %652 = vmatpush2.bf16.msra.mxu0 0
      %653 = vmatprep.subr.bf16.mxu0 0
      %654 = vmatpush2.bf16.msra.mxu0 0
      %655 = vmatprep.subr.bf16.mxu0 0
      %656 = vmatpush2.bf16.msra.mxu0 0
      %657 = vmatprep.subr.bf16.mxu0 0
      %658 = vmatpush2.bf16.msra.mxu0 0
      %659 = vmatprep.mubr.bf16.mxu0 0
      %660 = vmatmul.mubr.bf16.gmra.mxu0 %v584
      %v661 = vpop.f32.mrf.mxu0
      %v662 = vadd.f32 %v494, %v661
      %v663 = vpop.f32.mrf.mxu0
      %v664 = vadd.f32 %v498, %v663
      %v665 = vpop.f32.mrf.mxu0
      %v666 = vpop.f32.mrf.mxu0
      %667 = vdwg.mxu0
      %v668 = vpack.c.bf16 %v621, %v621
      %v669 = vpack.c.bf16 %v623, %v623
      %v670 = vpack.c.bf16 %v662, %v662
      %v671 = vpack.c.bf16 %v664, %v664
      %v676 = vunpack.c.l.b16 %v668
      %v677 = vunpack.c.l.b16 %v669
      %v678 = vunpack.c.l.b16 %v670
      %v679 = vunpack.c.l.b16 %v671
      %v680 = vpack.c.b16 %v677, %v676
      %v681 = vpack.c.b16 %v679, %v678
      %684 = vst [vmem:[%s278] sm:$0xff] %v680
      %685 = vst [vmem:[%s278 + $0x8] sm:$0xff] %v681
      %p686 = scmp.lt.s32.totalorder %s18, 1
      %s687 = scalar_select %p686, %s18, 1
      %s688 = smul.addr %s687, 4
      %s689 = smul.addr %s688, 4
      %s690 = scalar_lea.vmem %s7, %s689
      // Predicated region
      $region49: #{video_lstm_forward.2} parent=47 // pred_check
        %p691 = pneg %p188
      $region50: #{video_lstm_forward.2} parent=47 // pred_check_branch
        %693 = sbr.rel (%p691) target = $region52
      $region51: #{video_lstm_forward.2} parent=47 // pred_region
        _
      $region52: #{video_lstm_forward.2} parent=47 // pred_fallthru
        _
    $region48: #{video_lstm_forward.2} parent=5 // pred_fallthru
      _
    %p694 = scmp.le.s32.totalorder 2, %s13
    // Predicated region
    $region53: #{video_lstm_forward.2} parent=5 // pred_check
      %p695 = pneg %p694
    $region54: #{video_lstm_forward.2} parent=5 // pred_check_branch
      %697 = sbr.rel (%p695) target = $region56
    $region55: #{video_lstm_forward.2} parent=5 // pred_region
      %s698 = ssub.s32 %s13, 2
      // Predicated region
      $region57: #{video_lstm_forward.2} parent=55 // pred_check
        %p699 = pneg %p194
      $region58: #{video_lstm_forward.2} parent=55 // pred_check_branch
        %701 = sbr.rel (%p699) target = $region60
      $region59: #{video_lstm_forward.2} parent=55 // pred_region
        %p702 = scmp.lt.s32.totalorder %s19, 1
        %s703 = scalar_select %p702, %s19, 1
        %s704 = smul.addr %s703, 4
        %s705 = smul.addr %s704, 4
        %s706 = scalar_lea.vmem %s7, %s705
      $region60: #{video_lstm_forward.2} parent=55 // pred_fallthru
        _
    $region56: #{video_lstm_forward.2} parent=5 // pred_fallthru
      _
  $region6: #{video_lstm_forward.2} parent=0 // loop_footer
    %s17 = sadd.s32 1, %s13
  $region7: #{video_lstm_forward.2} parent=0 // loop_footer_branch
    %12 = sbr.rel target = $region3
  $region8: #{video_lstm_forward.2} parent=0 // loop_exit
    _

// kernel: video_lstm_forward.3
$region0: #{video_lstm_forward.3}
  #allocation0 [shape = 'u32[]', space=smem, size = 0x4, offset = 0x4, fixed_abs, tag = 'smem constant byte address 0x4 - core index']
  #allocation1 [shape = 'u32[144,128]{1,0:T(1,128)}', space=vmem, size = 0x12000, scoped, tag = 'internal scratch']
  #allocation2 [shape = 'f32[2,128]{1,0:T(2,128)}', space=vmem, size = 0x400, scoped, tag = 'scratch operand']
  #allocation3 [shape = 'f32[2,128]{1,0:T(2,128)}', space=vmem, size = 0x400, scoped, tag = 'scratch operand']
  %s0 = inlined_call_operand.vmem [shape: bf16[8,2,512], index: 0, kind: input, shape index: {}]
  %s1 = inlined_call_operand.vmem [shape: bf16[128,512], index: 1, kind: input, shape index: {}]
  %s2 = inlined_call_operand.vmem [shape: bf16[128,128], index: 2, kind: input, shape index: {}]
  %s3 = inlined_call_operand.vmem [shape: f32[1,128], index: 3, kind: input, shape index: {}]
  %s4 = inlined_call_operand.hbm [shape: f32[2,128], index: 4, kind: output, shape index: {}]
  %s5 = sld [smem:[#allocation0]]
  $region57: #{video_lstm_forward.3} parent=0
    _
  %s7 = ssub.s32 1, %s5
  %s8 = scalar_select 0, %s7, %s5
  $region1: #{video_lstm_forward.3} parent=0
    #allocation4 [shape = 'u8[1024]{0}', space=vmem, size = 0x400, scoped, tag = 'output window, operand 0, single buffered']
    #allocation5 [shape = 's32[2]{0}', space=sflag, size = 0x8, scoped, tag = 'scoped memory for video_lstm_forward.3']
    %9 = vsyncpa [#allocation5], 0
    loop: start=0, step=1, limit=4
    $region2: #{video_lstm_forward.3} parent=1 // loop_pre_header
      _
    $region3: #{video_lstm_forward.3} parent=1 // loop_header
      %s11 = sphi 0, %s15
      %p12 = scmp.ge.s32.totalorder %s11, 4
      %s21 = sphi 0, %s23
      %s24 = sphi 0, %s21
      %s25 = sphi 0, %s24
      %s41 = sphi 0, %s25
      %s45 = sphi 0, %s45
      %s47 = sphi 0, %s45
      %s48 = sphi 0, %s47
      %s62 = sphi 0, %s48
      %s66 = sphi 0, %s66
      %s68 = sphi 0, %s66
      %s69 = sphi 0, %s68
      %s83 = sphi 0, %s69
      %s87 = sphi 0, %s87
      %s89 = sphi 0, %s87
      %s90 = sphi 0, %s89
      %s104 = sphi 0, %s90
      %s108 = sphi 0, %s108
      %s110 = sphi 0, %s108
      %s111 = sphi 0, %s110
      %s125 = sphi 0, %s111
    $region4: #{video_lstm_forward.3} parent=1 // loop_header_branch
      %14 = sbr.rel (%p12) target = $region8
    $region5: #{video_lstm_forward.3} parent=1 // loop_body
      %s16 = ssub.s32 %s11, 1
      %s17 = ssub.s32 %s11, 2
      %s18 = sadd.s32 %s11, 1
      %s19 = ssub.s32 %s11, %s18
      %p20 = scmp.eq.s32.totalorder %s19, 0
      %s22 = sadd.s32 %s21, 1
      %s23 = scalar_select %p20, %s21, %s22
      %p26 = pneg %p20
      %p27 = scmp.eq.s32.totalorder %s11, 1
      %p28 = por %p26, %p27
      %p29 = scmp.ne.s32.totalorder %s21, %s24
      %p30 = scmp.eq.s32.totalorder %s11, 0
      %p31 = por %p29, %p30
      %p32 = scmp.ne.s32.totalorder %s21, %s24
      %p33 = scmp.eq.s32.totalorder %s16, 1
      %p34 = por %p32, %p33
      %p35 = scmp.ne.s32.totalorder %s24, %s25
      %p36 = scmp.eq.s32.totalorder %s16, 0
      %p37 = por %p35, %p36
      %p38 = scmp.ne.s32.totalorder %s24, %s25
      %p39 = scmp.eq.s32.totalorder %s17, 1
      %p40 = por %p38, %p39
      %p42 = scmp.ne.s32.totalorder %s25, %s41
      %p43 = scmp.eq.s32.totalorder %s17, 0
      %p44 = por %p42, %p43
      %s46 = sadd.s32 %s45, 1
      %p49 = scmp.eq.s32.totalorder %s11, 1
      %p50 = scmp.ne.s32.totalorder %s45, %s47
      %p51 = scmp.eq.s32.totalorder %s11, 0
      %p52 = por %p50, %p51
      %p53 = scmp.ne.s32.totalorder %s45, %s47
      %p54 = scmp.eq.s32.totalorder %s16, 1
      %p55 = por %p53, %p54
      %p56 = scmp.ne.s32.totalorder %s47, %s48
      %p57 = scmp.eq.s32.totalorder %s16, 0
      %p58 = por %p56, %p57
      %p59 = scmp.ne.s32.totalorder %s47, %s48
      %p60 = scmp.eq.s32.totalorder %s17, 1
      %p61 = por %p59, %p60
      %p63 = scmp.ne.s32.totalorder %s48, %s62
      %p64 = scmp.eq.s32.totalorder %s17, 0
      %p65 = por %p63, %p64
      %s67 = sadd.s32 %s66, 1
      %p70 = scmp.eq.s32.totalorder %s11, 1
      %p71 = scmp.ne.s32.totalorder %s66, %s68
      %p72 = scmp.eq.s32.totalorder %s11, 0
      %p73 = por %p71, %p72
      %p74 = scmp.ne.s32.totalorder %s66, %s68
      %p75 = scmp.eq.s32.totalorder %s16, 1
      %p76 = por %p74, %p75
      %p77 = scmp.ne.s32.totalorder %s68, %s69
      %p78 = scmp.eq.s32.totalorder %s16, 0
      %p79 = por %p77, %p78
      %p80 = scmp.ne.s32.totalorder %s68, %s69
      %p81 = scmp.eq.s32.totalorder %s17, 1
      %p82 = por %p80, %p81
      %p84 = scmp.ne.s32.totalorder %s69, %s83
      %p85 = scmp.eq.s32.totalorder %s17, 0
      %p86 = por %p84, %p85
      %s88 = sadd.s32 %s87, 1
      %p91 = scmp.eq.s32.totalorder %s11, 1
      %p92 = scmp.ne.s32.totalorder %s87, %s89
      %p93 = scmp.eq.s32.totalorder %s11, 0
      %p94 = por %p92, %p93
      %p95 = scmp.ne.s32.totalorder %s87, %s89
      %p96 = scmp.eq.s32.totalorder %s16, 1
      %p97 = por %p95, %p96
      %p98 = scmp.ne.s32.totalorder %s89, %s90
      %p99 = scmp.eq.s32.totalorder %s16, 0
      %p100 = por %p98, %p99
      %p101 = scmp.ne.s32.totalorder %s89, %s90
      %p102 = scmp.eq.s32.totalorder %s17, 1
      %p103 = por %p101, %p102
      %p105 = scmp.ne.s32.totalorder %s90, %s104
      %p106 = scmp.eq.s32.totalorder %s17, 0
      %p107 = por %p105, %p106
      %s109 = sadd.s32 %s108, 1
      %p112 = scmp.eq.s32.totalorder %s11, 1
      %p113 = scmp.ne.s32.totalorder %s108, %s110
      %p114 = scmp.eq.s32.totalorder %s11, 0
      %p115 = por %p113, %p114
      %p116 = scmp.ne.s32.totalorder %s108, %s110
      %p117 = scmp.eq.s32.totalorder %s16, 1
      %p118 = por %p116, %p117
      %p119 = scmp.ne.s32.totalorder %s110, %s111
      %p120 = scmp.eq.s32.totalorder %s16, 0
      %p121 = por %p119, %p120
      %p122 = scmp.ne.s32.totalorder %s110, %s111
      %p123 = scmp.eq.s32.totalorder %s17, 1
      %p124 = por %p122, %p123
      %p126 = scmp.ne.s32.totalorder %s111, %s125
      %p127 = scmp.eq.s32.totalorder %s17, 0
      %p128 = por %p126, %p127
      %p129 = scmp.le.s32.totalorder 1, %s11
      %p130 = scmp.lt.s32.totalorder %s11, 3
      %p131 = pnand %p129, %p130
      %p132 = pneg %p131
      // Predicated region
      $region9: #{video_lstm_forward.3} parent=5 // pred_check
        _
      $region10: #{video_lstm_forward.3} parent=5 // pred_check_branch
        %134 = sbr.rel (%p131) target = $region12
      $region11: #{video_lstm_forward.3} parent=5 // pred_region
        %s135 = ssub.s32 %s11, 1
        // Predicated region
        $region13: #{video_lstm_forward.3} parent=11 // pred_check
          %p136 = pneg %p58
        $region14: #{video_lstm_forward.3} parent=11 // pred_check_branch
          %138 = sbr.rel (%p136) target = $region16
        $region15: #{video_lstm_forward.3} parent=11 // pred_region
          _
        $region16: #{video_lstm_forward.3} parent=11 // pred_fallthru
          _
        // Predicated region
        $region17: #{video_lstm_forward.3} parent=11 // pred_check
          %p139 = pneg %p79
        $region18: #{video_lstm_forward.3} parent=11 // pred_check_branch
          %141 = sbr.rel (%p139) target = $region20
        $region19: #{video_lstm_forward.3} parent=11 // pred_region
          _
        $region20: #{video_lstm_forward.3} parent=11 // pred_fallthru
          _
        // Predicated region
        $region21: #{video_lstm_forward.3} parent=11 // pred_check
          %p142 = pneg %p100
        $region22: #{video_lstm_forward.3} parent=11 // pred_check_branch
          %144 = sbr.rel (%p142) target = $region24
        $region23: #{video_lstm_forward.3} parent=11 // pred_region
          _
        $region24: #{video_lstm_forward.3} parent=11 // pred_fallthru
          _
      $region12: #{video_lstm_forward.3} parent=5 // pred_fallthru
        _
      %p145 = scmp.lt.s32.totalorder %s11, 2
      // Predicated region
      $region25: #{video_lstm_forward.3} parent=5 // pred_check
        %p146 = pneg %p145
      $region26: #{video_lstm_forward.3} parent=5 // pred_check_branch
        %148 = sbr.rel (%p146) target = $region28
      $region27: #{video_lstm_forward.3} parent=5 // pred_region
        // Predicated region
        $region29: #{video_lstm_forward.3} parent=27 // pred_check
          %p149 = pneg %p31
        $region30: #{video_lstm_forward.3} parent=27 // pred_check_branch
          %151 = sbr.rel (%p149) target = $region32
        $region31: #{video_lstm_forward.3} parent=27 // pred_region
          %s152 = smul.u32 4, %s11
          %p153 = scmp.lt.s32.totalorder %s152, 7
          %s154 = scalar_select %p153, %s152, 7
          %s155 = smul.addr %s154, 4
          %s156 = scalar_lea.vmem %s0, %s155
          %s157 = smul.u32 4, %s11
        $region32: #{video_lstm_forward.3} parent=27 // pred_fallthru
          _
      $region28: #{video_lstm_forward.3} parent=5 // pred_fallthru
        _
      %p158 = scmp.le.s32.totalorder 1, %s11
      %p159 = scmp.lt.s32.totalorder %s11, 3
      %p160 = pnand %p158, %p159
      %p161 = pneg %p160
      // Predicated region
      $region33: #{video_lstm_forward.3} parent=5 // pred_check
        _
      $region34: #{video_lstm_forward.3} parent=5 // pred_check_branch
        %163 = sbr.rel (%p160) target = $region36
      $region35: #{video_lstm_forward.3} parent=5 // pred_region
        %s164 = ssub.s32 %s11, 1
        %s165 = smul.u32 4, %s16
        %p166 = scmp.lt.s32.totalorder %s165, 7
        %s167 = scalar_select %p166, %s165, 7
        %s168 = smul.addr %s167, 4
        %s169 = scalar_lea.vmem %s0, %s168
        %p170 = pneg %p37
        %p171 = pneg %p34
        %p172 = pneg %p58
        %p173 = pneg %p55
        %p174 = pneg %p79
        %p175 = pneg %p76
        %p176 = pneg %p100
        %p177 = pneg %p97
        %p178 = pneg %p121
        %p179 = pneg %p118
        %s180 = smul.u32 4, %s16
        %p181 = scmp.lt.s32.totalorder %s180, 7
        %s182 = scalar_select %p181, %s180, 7
        %s183 = smul.addr %s182, 4
        %s184 = scalar_lea.vmem %s0, %s183
        %s185 = smul.u32 4, %s16
        %p187 = scmp.eq.s32.totalorder %s16, 0
        // Predicated region
        $region37: #{video_lstm_forward.3} parent=35 // pred_check
          %p188 = pneg %p187
        $region38: #{video_lstm_forward.3} parent=35 // pred_check_branch
          %190 = sbr.rel (%p188) target = $region40
        $region39: #{video_lstm_forward.3} parent=35 // pred_region
          %191 = vst [vmem:[#allocation2] sm:$0x3] 0.0
          %192 = vst [vmem:[#allocation3] sm:$0x3] 0.0
        $region40: #{video_lstm_forward.3} parent=35 // pred_fallthru
          _
        %v193 = vld [vmem:[%s1] sm:$0xff]
        %v194 = vld [vmem:[%s1 + $0x8] sm:$0xff]
        %v195 = vld [vmem:[%s1 + $0x10] sm:$0xff]
        %v196 = vld [vmem:[%s1 + $0x18] sm:$0xff]
        %v197 = vld [vmem:[%s1 + $0x20] sm:$0xff]
        %v198 = vld [vmem:[%s1 + $0x28] sm:$0xff]
        %v199 = vld [vmem:[%s1 + $0x30] sm:$0xff]
        %v200 = vld [vmem:[%s1 + $0x38] sm:$0xff]
        %v201 = vld [vmem:[%s1 + $0x40] sm:$0xff]
        %v202 = vld [vmem:[%s1 + $0x48] sm:$0xff]
        %v203 = vld [vmem:[%s1 + $0x50] sm:$0xff]
        %v204 = vld [vmem:[%s1 + $0x58] sm:$0xff]
        %v205 = vld [vmem:[%s1 + $0x60] sm:$0xff]
        %v206 = vld [vmem:[%s1 + $0x68] sm:$0xff]
        %v207 = vld [vmem:[%s1 + $0x70] sm:$0xff]
        %v208 = vld [vmem:[%s1 + $0x78] sm:$0xff]
        %v209 = vld [vmem:[%s1 + $0x80] sm:$0xff]
        %v210 = vld [vmem:[%s1 + $0x88] sm:$0xff]
        %v211 = vld [vmem:[%s1 + $0x90] sm:$0xff]
        %v212 = vld [vmem:[%s1 + $0x98] sm:$0xff]
        %v213 = vld [vmem:[%s1 + $0xa0] sm:$0xff]
        %v214 = vld [vmem:[%s1 + $0xa8] sm:$0xff]
        %v215 = vld [vmem:[%s1 + $0xb0] sm:$0xff]
        %v216 = vld [vmem:[%s1 + $0xb8] sm:$0xff]
        %v217 = vld [vmem:[%s1 + $0xc0] sm:$0xff]
        %v218 = vld [vmem:[%s1 + $0xc8] sm:$0xff]
        %v219 = vld [vmem:[%s1 + $0xd0] sm:$0xff]
        %v220 = vld [vmem:[%s1 + $0xd8] sm:$0xff]
        %v221 = vld [vmem:[%s1 + $0xe0] sm:$0xff]
        %v222 = vld [vmem:[%s1 + $0xe8] sm:$0xff]
        %v223 = vld [vmem:[%s1 + $0xf0] sm:$0xff]
        %v224 = vld [vmem:[%s1 + $0xf8] sm:$0xff]
        %v225 = vld [vmem:[#allocation2] sm:$0x3]
        %v226 = vld [vmem:[#allocation3] sm:$0x3]
        %v227 = vld [vmem:[%s184] sm:$0xf]
        %v228 = vunpack.c.l.bf16 %v227
        %v229 = vpack.c.bf16 %v225, %v225
        %v262 = vunpack.c.l.b16 %v193
        %v263 = vunpack.c.h.b16 %v193
        %v264 = vunpack.c.l.b16 %v194
        %v265 = vunpack.c.h.b16 %v194
        %v266 = vunpack.c.l.b16 %v195
        %v267 = vunpack.c.h.b16 %v195
        %v268 = vunpack.c.l.b16 %v196
        %v269 = vunpack.c.h.b16 %v196
        %v270 = vunpack.c.l.b16 %v197
        %v271 = vunpack.c.h.b16 %v197
        %v272 = vunpack.c.l.b16 %v198
        %v273 = vunpack.c.h.b16 %v198
        %v274 = vunpack.c.l.b16 %v199
        %v275 = vunpack.c.h.b16 %v199
        %v276 = vunpack.c.l.b16 %v200
        %v277 = vunpack.c.h.b16 %v200
        %v278 = vunpack.c.l.b16 %v201
        %v279 = vunpack.c.h.b16 %v201
        %v280 = vunpack.c.l.b16 %v202
        %v281 = vunpack.c.h.b16 %v202
        %v282 = vunpack.c.l.b16 %v203
        %v283 = vunpack.c.h.b16 %v203
        %v284 = vunpack.c.l.b16 %v204
        %v285 = vunpack.c.h.b16 %v204
        %v286 = vunpack.c.l.b16 %v205
        %v287 = vunpack.c.h.b16 %v205
        %v288 = vunpack.c.l.b16 %v206
        %v289 = vunpack.c.h.b16 %v206
        %v290 = vunpack.c.l.b16 %v207
        %v291 = vunpack.c.h.b16 %v207
        %v292 = vunpack.c.l.b16 %v208
        %v293 = vunpack.c.h.b16 %v208
        %v294 = vunpack.c.l.b16 %v209
        %v295 = vunpack.c.h.b16 %v209
        %v296 = vunpack.c.l.b16 %v210
        %v297 = vunpack.c.h.b16 %v210
        %v298 = vunpack.c.l.b16 %v211
        %v299 = vunpack.c.h.b16 %v211
        %v300 = vunpack.c.l.b16 %v212
        %v301 = vunpack.c.h.b16 %v212
        %v302 = vunpack.c.l.b16 %v213
        %v303 = vunpack.c.h.b16 %v213
        %v304 = vunpack.c.l.b16 %v214
        %v305 = vunpack.c.h.b16 %v214
        %v306 = vunpack.c.l.b16 %v215
        %v307 = vunpack.c.h.b16 %v215
        %v308 = vunpack.c.l.b16 %v216
        %v309 = vunpack.c.h.b16 %v216
        %v310 = vunpack.c.l.b16 %v217
        %v311 = vunpack.c.h.b16 %v217
        %v312 = vunpack.c.l.b16 %v218
        %v313 = vunpack.c.h.b16 %v218
        %v314 = vunpack.c.l.b16 %v219
        %v315 = vunpack.c.h.b16 %v219
        %v316 = vunpack.c.l.b16 %v220
        %v317 = vunpack.c.h.b16 %v220
        %v318 = vunpack.c.l.b16 %v221
        %v319 = vunpack.c.h.b16 %v221
        %v320 = vunpack.c.l.b16 %v222
        %v321 = vunpack.c.h.b16 %v222
        %v322 = vunpack.c.l.b16 %v223
        %v323 = vunpack.c.h.b16 %v223
        %v324 = vunpack.c.l.b16 %v224
        %v325 = vunpack.c.h.b16 %v224
        %v326 = vpack.c.b16 %v266, %v262
        %v327 = vpack.c.b16 %v267, %v263
        %v328 = vpack.c.b16 %v268, %v264
        %v329 = vpack.c.b16 %v269, %v265
        %v330 = vpack.c.b16 %v274, %v270
        %v331 = vpack.c.b16 %v275, %v271
        %v332 = vpack.c.b16 %v276, %v272
        %v333 = vpack.c.b16 %v277, %v273
        %v334 = vpack.c.b16 %v282, %v278
        %v335 = vpack.c.b16 %v283, %v279
        %v336 = vpack.c.b16 %v284, %v280
        %v337 = vpack.c.b16 %v285, %v281
        %v338 = vpack.c.b16 %v290, %v286
        %v339 = vpack.c.b16 %v291, %v287
        %v340 = vpack.c.b16 %v292, %v288
        %v341 = vpack.c.b16 %v293, %v289
        %v342 = vpack.c.b16 %v298, %v294
        %v343 = vpack.c.b16 %v299, %v295
        %v344 = vpack.c.b16 %v300, %v296
        %v345 = vpack.c.b16 %v301, %v297
        %v346 = vpack.c.b16 %v306, %v302
        %v347 = vpack.c.b16 %v307, %v303
        %v348 = vpack.c.b16 %v308, %v304
        %v349 = vpack.c.b16 %v309, %v305
        %v350 = vpack.c.b16 %v314, %v310
        %v351 = vpack.c.b16 %v315, %v311
        %v352 = vpack.c.b16 %v316, %v312
        %v353 = vpack.c.b16 %v317, %v313
        %v354 = vpack.c.b16 %v322, %v318
        %v355 = vpack.c.b16 %v323, %v319
        %v356 = vpack.c.b16 %v324, %v320
        %v357 = vpack.c.b16 %v325, %v321
        %390 = vmatprep.subr.bf16.mxu0 %v355
        %391 = vmatpush1.bf16.msra.mxu0 %v354
        %392 = vmatprep.subr.bf16.mxu0 %v351
        %393 = vmatpush1.bf16.msra.mxu0 %v350
        %394 = vmatprep.subr.bf16.mxu0 %v347
        %395 = vmatpush1.bf16.msra.mxu0 %v346
        %396 = vmatprep.subr.bf16.mxu0 %v343
        %397 = vmatpush1.bf16.msra.mxu0 %v342
        %398 = vmatprep.subr.bf16.mxu0 %v339
        %399 = vmatpush1.bf16.msra.mxu0 %v338
        %400 = vmatprep.subr.bf16.mxu0 %v335
        %401 = vmatpush1.bf16.msra.mxu0 %v334
        %402 = vmatprep.subr.bf16.mxu0 %v331
        %403 = vmatpush1.bf16.msra.mxu0 %v330
        %404 = vmatprep.subr.bf16.mxu0 %v327
        %405 = vmatpush1.bf16.msra.mxu0 %v326
        %406 = vmatprep.subr.bf16.mxu0 0
        %407 = vmatpush2.bf16.msra.mxu0 0
        %408 = vmatprep.subr.bf16.mxu0 0
        %409 = vmatpush2.bf16.msra.mxu0 0
        %410 = vmatprep.subr.bf16.mxu0 0
        %411 = vmatpush2.bf16.msra.mxu0 0
        %412 = vmatprep.subr.bf16.mxu0 0
        %413 = vmatpush2.bf16.msra.mxu0 0
        %414 = vmatprep.subr.bf16.mxu0 0
        %415 = vmatpush2.bf16.msra.mxu0 0
        %416 = vmatprep.subr.bf16.mxu0 0
        %417 = vmatpush2.bf16.msra.mxu0 0
        %418 = vmatprep.subr.bf16.mxu0 0
        %419 = vmatpush2.bf16.msra.mxu0 0
        %420 = vmatprep.subr.bf16.mxu0 0
        %421 = vmatpush2.bf16.msra.mxu0 0
        %422 = vmatprep.mubr.bf16.mxu0 0
        %423 = vmatmul.mubr.bf16.gmra.mxu0 %v229
        %v424 = vpop.f32.mrf.mxu0
        %v425 = vadd.f32 0.0, %v424
        %v426 = vpop.f32.mrf.mxu0
        %v427 = vadd.f32 0.0, %v426
        %v428 = vpop.f32.mrf.mxu0
        %v429 = vpop.f32.mrf.mxu0
        %430 = vdwg.mxu0
        %431 = vmatprep.subr.bf16.mxu0 %v357
        %432 = vmatpush1.bf16.msra.mxu0 %v356
        %433 = vmatprep.subr.bf16.mxu0 %v353
        %434 = vmatpush1.bf16.msra.mxu0 %v352
        %435 = vmatprep.subr.bf16.mxu0 %v349
        %436 = vmatpush1.bf16.msra.mxu0 %v348
        %437 = vmatprep.subr.bf16.mxu0 %v345
        %438 = vmatpush1.bf16.msra.mxu0 %v344
        %439 = vmatprep.subr.bf16.mxu0 %v341
        %440 = vmatpush1.bf16.msra.mxu0 %v340
        %441 = vmatprep.subr.bf16.mxu0 %v337
        %442 = vmatpush1.bf16.msra.mxu0 %v336
        %443 = vmatprep.subr.bf16.mxu0 %v333
        %444 = vmatpush1.bf16.msra.mxu0 %v332
        %445 = vmatprep.subr.bf16.mxu0 %v329
        %446 = vmatpush1.bf16.msra.mxu0 %v328
        %447 = vmatprep.subr.bf16.mxu0 0
        %448 = vmatpush2.bf16.msra.mxu0 0
        %449 = vmatprep.subr.bf16.mxu0 0
        %450 = vmatpush2.bf16.msra.mxu0 0
        %451 = vmatprep.subr.bf16.mxu0 0
        %452 = vmatpush2.bf16.msra.mxu0 0
        %453 = vmatprep.subr.bf16.mxu0 0
        %454 = vmatpush2.bf16.msra.mxu0 0
        %455 = vmatprep.subr.bf16.mxu0 0
        %456 = vmatpush2.bf16.msra.mxu0 0
        %457 = vmatprep.subr.bf16.mxu0 0
        %458 = vmatpush2.bf16.msra.mxu0 0
        %459 = vmatprep.subr.bf16.mxu0 0
        %460 = vmatpush2.bf16.msra.mxu0 0
        %461 = vmatprep.subr.bf16.mxu0 0
        %462 = vmatpush2.bf16.msra.mxu0 0
        %463 = vmatprep.mubr.bf16.mxu0 0
        %464 = vmatmul.mubr.bf16.gmra.mxu0 %v229
        %v465 = vpop.f32.mrf.mxu0
        %v466 = vadd.f32 0.0, %v465
        %v467 = vpop.f32.mrf.mxu0
        %v468 = vadd.f32 0.0, %v467
        %v469 = vpop.f32.mrf.mxu0
        %v470 = vpop.f32.mrf.mxu0
        %471 = vdwg.mxu0
        %v476 = vcombine.low %v425, %v427
        %v477 = vcombine.low %v466, %v468
        %v479 = vunpack.c.l.s4 1983009808
        %v480 = vunpack.c.0.s8 %v479
        %v481 = vlaneseq
        %v482 = vshrl.u32 %v481, 7
        %v483 = vsub.s32 %v480, %v482
        %v484 = vrot.slane %v476, %v483
        %v486 = vunpack.c.l.s4 1983009808
        %v487 = vunpack.c.0.s8 %v486
        %v488 = vlaneseq
        %v489 = vshrl.u32 %v488, 7
        %v490 = vsub.s32 %v487, %v489
        %v491 = vrot.slane %v477, %v490
        %v492 = vcombine.low %v484, %v491
        %v494 = vadd.f32 %v228, %v492
        %v495 = vxor.u32 %v494, 2147483648
        %v496 = vmul.f32 %v495, 1.442695
        %v497 = vpow.pop %v496
        %v498 = vadd.f32 %v497, 1.0
        %v499 = vrcp.pop %v498
        %v500 = vmul.f32 1.0, %v499
        %v502 = vrot.slane %v494, 2
        %v504 = vxor.u32 %v502, 2147483648
        %v505 = vmul.f32 %v504, 1.442695
        %v506 = vpow.pop %v505
        %v507 = vadd.f32 %v506, 1.0
        %v508 = vrcp.pop %v507
        %v509 = vmul.f32 1.0, %v508
        %v510 = vrot.slane %v494, 4
        %v512 = vtanh.pop %v510
        %v513 = vrot.slane %v494, 6
        %v515 = vxor.u32 %v513, 2147483648
        %v516 = vmul.f32 %v515, 1.442695
        %v517 = vpow.pop %v516
        %v518 = vadd.f32 %v517, 1.0
        %v519 = vrcp.pop %v518
        %v520 = vmul.f32 1.0, %v519
        %v521 = vmul.f32 %v509, %v226
        %v522 = vmul.f32 %v500, %v512
        %v523 = vadd.f32 %v521, %v522
        %v524 = vtanh.pop %v523
        %v525 = vmul.f32 %v520, %v524
        %s526 = smul.u32 %s16, 4
        %p527 = scmp.lt.s32.totalorder %s526, 8
        %s528 = scalar_select %p527, 1, 0
        %v529 = vstv %s528
        %vm530 = vcmp.eq.s32.totalorder %v529, 1
        %v531 = vsel %vm530, %v525, %v225
        %532 = vst [vmem:[#allocation2] sm:$0x3] %v531
        %v533 = vsel %vm530, %v523, %v226
        %534 = vst [vmem:[#allocation3] sm:$0x3] %v533
        %v535 = vld [vmem:[#allocation2] sm:$0x3]
        %v536 = vld [vmem:[#allocation3] sm:$0x3]
        %s537 = scalar_lea.vmem %s184, 4
        %v538 = vld [vmem:[%s537] sm:$0xf]
        %v539 = vunpack.c.l.bf16 %v538
        %v540 = vpack.c.bf16 %v535, %v535
        %541 = vmatprep.subr.bf16.mxu0 %v355
        %542 = vmatpush1.bf16.msra.mxu0 %v354
        %543 = vmatprep.subr.bf16.mxu0 %v351
        %544 = vmatpush1.bf16.msra.mxu0 %v350
        %545 = vmatprep.subr.bf16.mxu0 %v347
        %546 = vmatpush1.bf16.msra.mxu0 %v346
        %547 = vmatprep.subr.bf16.mxu0 %v343
        %548 = vmatpush1.bf16.msra.mxu0 %v342
        %549 = vmatprep.subr.bf16.mxu0 %v339
        %550 = vmatpush1.bf16.msra.mxu0 %v338
        %551 = vmatprep.subr.bf16.mxu0 %v335
        %552 = vmatpush1.bf16.msra.mxu0 %v334
        %553 = vmatprep.subr.bf16.mxu0 %v331
        %554 = vmatpush1.bf16.msra.mxu0 %v330
        %555 = vmatprep.subr.bf16.mxu0 %v327
        %556 = vmatpush1.bf16.msra.mxu0 %v326
        %557 = vmatprep.subr.bf16.mxu0 0
        %558 = vmatpush2.bf16.msra.mxu0 0
        %559 = vmatprep.subr.bf16.mxu0 0
        %560 = vmatpush2.bf16.msra.mxu0 0
        %561 = vmatprep.subr.bf16.mxu0 0
        %562 = vmatpush2.bf16.msra.mxu0 0
        %563 = vmatprep.subr.bf16.mxu0 0
        %564 = vmatpush2.bf16.msra.mxu0 0
        %565 = vmatprep.subr.bf16.mxu0 0
        %566 = vmatpush2.bf16.msra.mxu0 0
        %567 = vmatprep.subr.bf16.mxu0 0
        %568 = vmatpush2.bf16.msra.mxu0 0
        %569 = vmatprep.subr.bf16.mxu0 0
        %570 = vmatpush2.bf16.msra.mxu0 0
        %571 = vmatprep.subr.bf16.mxu0 0
        %572 = vmatpush2.bf16.msra.mxu0 0
        %573 = vmatprep.mubr.bf16.mxu0 0
        %574 = vmatmul.mubr.bf16.gmra.mxu0 %v540
        %v575 = vpop.f32.mrf.mxu0
        %v576 = vadd.f32 0.0, %v575
        %v577 = vpop.f32.mrf.mxu0
        %v578 = vadd.f32 0.0, %v577
        %v579 = vpop.f32.mrf.mxu0
        %v580 = vpop.f32.mrf.mxu0
        %581 = vdwg.mxu0
        %582 = vmatprep.subr.bf16.mxu0 %v357
        %583 = vmatpush1.bf16.msra.mxu0 %v356
        %584 = vmatprep.subr.bf16.mxu0 %v353
        %585 = vmatpush1.bf16.msra.mxu0 %v352
        %586 = vmatprep.subr.bf16.mxu0 %v349
        %587 = vmatpush1.bf16.msra.mxu0 %v348
        %588 = vmatprep.subr.bf16.mxu0 %v345
        %589 = vmatpush1.bf16.msra.mxu0 %v344
        %590 = vmatprep.subr.bf16.mxu0 %v341
        %591 = vmatpush1.bf16.msra.mxu0 %v340
        %592 = vmatprep.subr.bf16.mxu0 %v337
        %593 = vmatpush1.bf16.msra.mxu0 %v336
        %594 = vmatprep.subr.bf16.mxu0 %v333
        %595 = vmatpush1.bf16.msra.mxu0 %v332
        %596 = vmatprep.subr.bf16.mxu0 %v329
        %597 = vmatpush1.bf16.msra.mxu0 %v328
        %598 = vmatprep.subr.bf16.mxu0 0
        %599 = vmatpush2.bf16.msra.mxu0 0
        %600 = vmatprep.subr.bf16.mxu0 0
        %601 = vmatpush2.bf16.msra.mxu0 0
        %602 = vmatprep.subr.bf16.mxu0 0
        %603 = vmatpush2.bf16.msra.mxu0 0
        %604 = vmatprep.subr.bf16.mxu0 0
        %605 = vmatpush2.bf16.msra.mxu0 0
        %606 = vmatprep.subr.bf16.mxu0 0
        %607 = vmatpush2.bf16.msra.mxu0 0
        %608 = vmatprep.subr.bf16.mxu0 0
        %609 = vmatpush2.bf16.msra.mxu0 0
        %610 = vmatprep.subr.bf16.mxu0 0
        %611 = vmatpush2.bf16.msra.mxu0 0
        %612 = vmatprep.subr.bf16.mxu0 0
        %613 = vmatpush2.bf16.msra.mxu0 0
        %614 = vmatprep.mubr.bf16.mxu0 0
        %615 = vmatmul.mubr.bf16.gmra.mxu0 %v540
        %v616 = vpop.f32.mrf.mxu0
        %v617 = vadd.f32 0.0, %v616
        %v618 = vpop.f32.mrf.mxu0
        %v619 = vadd.f32 0.0, %v618
        %v620 = vpop.f32.mrf.mxu0
        %v621 = vpop.f32.mrf.mxu0
        %622 = vdwg.mxu0
        %v627 = vcombine.low %v576, %v578
        %v628 = vcombine.low %v617, %v619
        %v630 = vunpack.c.l.s4 1983009808
        %v631 = vunpack.c.0.s8 %v630
        %v632 = vlaneseq
        %v633 = vshrl.u32 %v632, 7
        %v634 = vsub.s32 %v631, %v633
        %v635 = vrot.slane %v627, %v634
        %v637 = vunpack.c.l.s4 1983009808
        %v638 = vunpack.c.0.s8 %v637
        %v639 = vlaneseq
        %v640 = vshrl.u32 %v639, 7
        %v641 = vsub.s32 %v638, %v640
        %v642 = vrot.slane %v628, %v641
        %v643 = vcombine.low %v635, %v642
        %v645 = vadd.f32 %v539, %v643
        %v646 = vxor.u32 %v645, 2147483648
        %v647 = vmul.f32 %v646, 1.442695
        %v648 = vpow.pop %v647
        %v649 = vadd.f32 %v648, 1.0
        %v650 = vrcp.pop %v649
        %v651 = vmul.f32 1.0, %v650
        %v653 = vrot.slane %v645, 2
        %v655 = vxor.u32 %v653, 2147483648
        %v656 = vmul.f32 %v655, 1.442695
        %v657 = vpow.pop %v656
        %v658 = vadd.f32 %v657, 1.0
        %v659 = vrcp.pop %v658
        %v660 = vmul.f32 1.0, %v659
        %v661 = vrot.slane %v645, 4
        %v663 = vtanh.pop %v661
        %v664 = vrot.slane %v645, 6
        %v666 = vxor.u32 %v664, 2147483648
        %v667 = vmul.f32 %v666, 1.442695
        %v668 = vpow.pop %v667
        %v669 = vadd.f32 %v668, 1.0
        %v670 = vrcp.pop %v669
        %v671 = vmul.f32 1.0, %v670
        %v672 = vmul.f32 %v660, %v536
        %v673 = vmul.f32 %v651, %v663
        %v674 = vadd.f32 %v672, %v673
        %v675 = vtanh.pop %v674
        %v676 = vmul.f32 %v671, %v675
        %s677 = sadd.s32 %s526, 1
        %p678 = scmp.lt.s32.totalorder %s677, 8
        %s679 = scalar_select %p678, 1, 0
        %v680 = vstv %s679
        %vm681 = vcmp.eq.s32.totalorder %v680, 1
        %v682 = vsel %vm681, %v676, %v535
        %683 = vst [vmem:[#allocation2] sm:$0x3] %v682
        %v684 = vsel %vm681, %v674, %v536
        %685 = vst [vmem:[#allocation3] sm:$0x3] %v684
        %v686 = vld [vmem:[#allocation2] sm:$0x3]
        %v687 = vld [vmem:[#allocation3] sm:$0x3]
        %s688 = scalar_lea.vmem %s184, 8
        %v689 = vld [vmem:[%s688] sm:$0xf]
        %v690 = vunpack.c.l.bf16 %v689
        %v691 = vpack.c.bf16 %v686, %v686
        %692 = vmatprep.subr.bf16.mxu0 %v355
        %693 = vmatpush1.bf16.msra.mxu0 %v354
        %694 = vmatprep.subr.bf16.mxu0 %v351
        %695 = vmatpush1.bf16.msra.mxu0 %v350
        %696 = vmatprep.subr.bf16.mxu0 %v347
        %697 = vmatpush1.bf16.msra.mxu0 %v346
        %698 = vmatprep.subr.bf16.mxu0 %v343
        %699 = vmatpush1.bf16.msra.mxu0 %v342
        %700 = vmatprep.subr.bf16.mxu0 %v339
        %701 = vmatpush1.bf16.msra.mxu0 %v338
        %702 = vmatprep.subr.bf16.mxu0 %v335
        %703 = vmatpush1.bf16.msra.mxu0 %v334
        %704 = vmatprep.subr.bf16.mxu0 %v331
        %705 = vmatpush1.bf16.msra.mxu0 %v330
        %706 = vmatprep.subr.bf16.mxu0 %v327
        %707 = vmatpush1.bf16.msra.mxu0 %v326
        %708 = vmatprep.subr.bf16.mxu0 0
        %709 = vmatpush2.bf16.msra.mxu0 0
        %710 = vmatprep.subr.bf16.mxu0 0
        %711 = vmatpush2.bf16.msra.mxu0 0
        %712 = vmatprep.subr.bf16.mxu0 0
        %713 = vmatpush2.bf16.msra.mxu0 0
        %714 = vmatprep.subr.bf16.mxu0 0
        %715 = vmatpush2.bf16.msra.mxu0 0
        %716 = vmatprep.subr.bf16.mxu0 0
        %717 = vmatpush2.bf16.msra.mxu0 0
        %718 = vmatprep.subr.bf16.mxu0 0
        %719 = vmatpush2.bf16.msra.mxu0 0
        %720 = vmatprep.subr.bf16.mxu0 0
        %721 = vmatpush2.bf16.msra.mxu0 0
        %722 = vmatprep.subr.bf16.mxu0 0
        %723 = vmatpush2.bf16.msra.mxu0 0
        %724 = vmatprep.mubr.bf16.mxu0 0
        %725 = vmatmul.mubr.bf16.gmra.mxu0 %v691
        %v726 = vpop.f32.mrf.mxu0
        %v727 = vadd.f32 0.0, %v726
        %v728 = vpop.f32.mrf.mxu0
        %v729 = vadd.f32 0.0, %v728
        %v730 = vpop.f32.mrf.mxu0
        %v731 = vpop.f32.mrf.mxu0
        %732 = vdwg.mxu0
        %733 = vmatprep.subr.bf16.mxu0 %v357
        %734 = vmatpush1.bf16.msra.mxu0 %v356
        %735 = vmatprep.subr.bf16.mxu0 %v353
        %736 = vmatpush1.bf16.msra.mxu0 %v352
        %737 = vmatprep.subr.bf16.mxu0 %v349
        %738 = vmatpush1.bf16.msra.mxu0 %v348
        %739 = vmatprep.subr.bf16.mxu0 %v345
        %740 = vmatpush1.bf16.msra.mxu0 %v344
        %741 = vmatprep.subr.bf16.mxu0 %v341
        %742 = vmatpush1.bf16.msra.mxu0 %v340
        %743 = vmatprep.subr.bf16.mxu0 %v337
        %744 = vmatpush1.bf16.msra.mxu0 %v336
        %745 = vmatprep.subr.bf16.mxu0 %v333
        %746 = vmatpush1.bf16.msra.mxu0 %v332
        %747 = vmatprep.subr.bf16.mxu0 %v329
        %748 = vmatpush1.bf16.msra.mxu0 %v328
        %749 = vmatprep.subr.bf16.mxu0 0
        %750 = vmatpush2.bf16.msra.mxu0 0
        %751 = vmatprep.subr.bf16.mxu0 0
        %752 = vmatpush2.bf16.msra.mxu0 0
        %753 = vmatprep.subr.bf16.mxu0 0
        %754 = vmatpush2.bf16.msra.mxu0 0
        %755 = vmatprep.subr.bf16.mxu0 0
        %756 = vmatpush2.bf16.msra.mxu0 0
        %757 = vmatprep.subr.bf16.mxu0 0
        %758 = vmatpush2.bf16.msra.mxu0 0
        %759 = vmatprep.subr.bf16.mxu0 0
        %760 = vmatpush2.bf16.msra.mxu0 0
        %761 = vmatprep.subr.bf16.mxu0 0
        %762 = vmatpush2.bf16.msra.mxu0 0
        %763 = vmatprep.subr.bf16.mxu0 0
        %764 = vmatpush2.bf16.msra.mxu0 0
        %765 = vmatprep.mubr.bf16.mxu0 0
        %766 = vmatmul.mubr.bf16.gmra.mxu0 %v691
        %v767 = vpop.f32.mrf.mxu0
        %v768 = vadd.f32 0.0, %v767
        %v769 = vpop.f32.mrf.mxu0
        %v770 = vadd.f32 0.0, %v769
        %v771 = vpop.f32.mrf.mxu0
        %v772 = vpop.f32.mrf.mxu0
        %773 = vdwg.mxu0
        %v778 = vcombine.low %v727, %v729
        %v779 = vcombine.low %v768, %v770
        %v781 = vunpack.c.l.s4 1983009808
        %v782 = vunpack.c.0.s8 %v781
        %v783 = vlaneseq
        %v784 = vshrl.u32 %v783, 7
        %v785 = vsub.s32 %v782, %v784
        %v786 = vrot.slane %v778, %v785
        %v788 = vunpack.c.l.s4 1983009808
        %v789 = vunpack.c.0.s8 %v788
        %v790 = vlaneseq
        %v791 = vshrl.u32 %v790, 7
        %v792 = vsub.s32 %v789, %v791
        %v793 = vrot.slane %v779, %v792
        %v794 = vcombine.low %v786, %v793
        %v796 = vadd.f32 %v690, %v794
        %v797 = vxor.u32 %v796, 2147483648
        %v798 = vmul.f32 %v797, 1.442695
        %v799 = vpow.pop %v798
        %v800 = vadd.f32 %v799, 1.0
        %v801 = vrcp.pop %v800
        %v802 = vmul.f32 1.0, %v801
        %v804 = vrot.slane %v796, 2
        %v806 = vxor.u32 %v804, 2147483648
        %v807 = vmul.f32 %v806, 1.442695
        %v808 = vpow.pop %v807
        %v809 = vadd.f32 %v808, 1.0
        %v810 = vrcp.pop %v809
        %v811 = vmul.f32 1.0, %v810
        %v812 = vrot.slane %v796, 4
        %v814 = vtanh.pop %v812
        %v815 = vrot.slane %v796, 6
        %v817 = vxor.u32 %v815, 2147483648
        %v818 = vmul.f32 %v817, 1.442695
        %v819 = vpow.pop %v818
        %v820 = vadd.f32 %v819, 1.0
        %v821 = vrcp.pop %v820
        %v822 = vmul.f32 1.0, %v821
        %v823 = vmul.f32 %v811, %v687
        %v824 = vmul.f32 %v802, %v814
        %v825 = vadd.f32 %v823, %v824
        %v826 = vtanh.pop %v825
        %v827 = vmul.f32 %v822, %v826
        %s828 = sadd.s32 %s526, 2
        %p829 = scmp.lt.s32.totalorder %s828, 8
        %s830 = scalar_select %p829, 1, 0
        %v831 = vstv %s830
        %vm832 = vcmp.eq.s32.totalorder %v831, 1
        %v833 = vsel %vm832, %v827, %v686
        %834 = vst [vmem:[#allocation2] sm:$0x3] %v833
        %v835 = vsel %vm832, %v825, %v687
        %836 = vst [vmem:[#allocation3] sm:$0x3] %v835
        %v837 = vld [vmem:[#allocation2] sm:$0x3]
        %v838 = vld [vmem:[#allocation3] sm:$0x3]
        %s839 = scalar_lea.vmem %s184, 12
        %v840 = vld [vmem:[%s839] sm:$0xf]
        %v841 = vunpack.c.l.bf16 %v840
        %v842 = vpack.c.bf16 %v837, %v837
        %843 = vmatprep.subr.bf16.mxu0 %v355
        %844 = vmatpush1.bf16.msra.mxu0 %v354
        %845 = vmatprep.subr.bf16.mxu0 %v351
        %846 = vmatpush1.bf16.msra.mxu0 %v350
        %847 = vmatprep.subr.bf16.mxu0 %v347
        %848 = vmatpush1.bf16.msra.mxu0 %v346
        %849 = vmatprep.subr.bf16.mxu0 %v343
        %850 = vmatpush1.bf16.msra.mxu0 %v342
        %851 = vmatprep.subr.bf16.mxu0 %v339
        %852 = vmatpush1.bf16.msra.mxu0 %v338
        %853 = vmatprep.subr.bf16.mxu0 %v335
        %854 = vmatpush1.bf16.msra.mxu0 %v334
        %855 = vmatprep.subr.bf16.mxu0 %v331
        %856 = vmatpush1.bf16.msra.mxu0 %v330
        %857 = vmatprep.subr.bf16.mxu0 %v327
        %858 = vmatpush1.bf16.msra.mxu0 %v326
        %859 = vmatprep.subr.bf16.mxu0 0
        %860 = vmatpush2.bf16.msra.mxu0 0
        %861 = vmatprep.subr.bf16.mxu0 0
        %862 = vmatpush2.bf16.msra.mxu0 0
        %863 = vmatprep.subr.bf16.mxu0 0
        %864 = vmatpush2.bf16.msra.mxu0 0
        %865 = vmatprep.subr.bf16.mxu0 0
        %866 = vmatpush2.bf16.msra.mxu0 0
        %867 = vmatprep.subr.bf16.mxu0 0
        %868 = vmatpush2.bf16.msra.mxu0 0
        %869 = vmatprep.subr.bf16.mxu0 0
        %870 = vmatpush2.bf16.msra.mxu0 0
        %871 = vmatprep.subr.bf16.mxu0 0
        %872 = vmatpush2.bf16.msra.mxu0 0
        %873 = vmatprep.subr.bf16.mxu0 0
        %874 = vmatpush2.bf16.msra.mxu0 0
        %875 = vmatprep.mubr.bf16.mxu0 0
        %876 = vmatmul.mubr.bf16.gmra.mxu0 %v842
        %v877 = vpop.f32.mrf.mxu0
        %v878 = vadd.f32 0.0, %v877
        %v879 = vpop.f32.mrf.mxu0
        %v880 = vadd.f32 0.0, %v879
        %v881 = vpop.f32.mrf.mxu0
        %v882 = vpop.f32.mrf.mxu0
        %883 = vdwg.mxu0
        %884 = vmatprep.subr.bf16.mxu0 %v357
        %885 = vmatpush1.bf16.msra.mxu0 %v356
        %886 = vmatprep.subr.bf16.mxu0 %v353
        %887 = vmatpush1.bf16.msra.mxu0 %v352
        %888 = vmatprep.subr.bf16.mxu0 %v349
        %889 = vmatpush1.bf16.msra.mxu0 %v348
        %890 = vmatprep.subr.bf16.mxu0 %v345
        %891 = vmatpush1.bf16.msra.mxu0 %v344
        %892 = vmatprep.subr.bf16.mxu0 %v341
        %893 = vmatpush1.bf16.msra.mxu0 %v340
        %894 = vmatprep.subr.bf16.mxu0 %v337
        %895 = vmatpush1.bf16.msra.mxu0 %v336
        %896 = vmatprep.subr.bf16.mxu0 %v333
        %897 = vmatpush1.bf16.msra.mxu0 %v332
        %898 = vmatprep.subr.bf16.mxu0 %v329
        %899 = vmatpush1.bf16.msra.mxu0 %v328
        %900 = vmatprep.subr.bf16.mxu0 0
        %901 = vmatpush2.bf16.msra.mxu0 0
        %902 = vmatprep.subr.bf16.mxu0 0
        %903 = vmatpush2.bf16.msra.mxu0 0
        %904 = vmatprep.subr.bf16.mxu0 0
        %905 = vmatpush2.bf16.msra.mxu0 0
        %906 = vmatprep.subr.bf16.mxu0 0
        %907 = vmatpush2.bf16.msra.mxu0 0
        %908 = vmatprep.subr.bf16.mxu0 0
        %909 = vmatpush2.bf16.msra.mxu0 0
        %910 = vmatprep.subr.bf16.mxu0 0
        %911 = vmatpush2.bf16.msra.mxu0 0
        %912 = vmatprep.subr.bf16.mxu0 0
        %913 = vmatpush2.bf16.msra.mxu0 0
        %914 = vmatprep.subr.bf16.mxu0 0
        %915 = vmatpush2.bf16.msra.mxu0 0
        %916 = vmatprep.mubr.bf16.mxu0 0
        %917 = vmatmul.mubr.bf16.gmra.mxu0 %v842
        %v918 = vpop.f32.mrf.mxu0
        %v919 = vadd.f32 0.0, %v918
        %v920 = vpop.f32.mrf.mxu0
        %v921 = vadd.f32 0.0, %v920
        %v922 = vpop.f32.mrf.mxu0
        %v923 = vpop.f32.mrf.mxu0
        %924 = vdwg.mxu0
        %v929 = vcombine.low %v878, %v880
        %v930 = vcombine.low %v919, %v921
        %v932 = vunpack.c.l.s4 1983009808
        %v933 = vunpack.c.0.s8 %v932
        %v934 = vlaneseq
        %v935 = vshrl.u32 %v934, 7
        %v936 = vsub.s32 %v933, %v935
        %v937 = vrot.slane %v929, %v936
        %v939 = vunpack.c.l.s4 1983009808
        %v940 = vunpack.c.0.s8 %v939
        %v941 = vlaneseq
        %v942 = vshrl.u32 %v941, 7
        %v943 = vsub.s32 %v940, %v942
        %v944 = vrot.slane %v930, %v943
        %v945 = vcombine.low %v937, %v944
        %v947 = vadd.f32 %v841, %v945
        %v948 = vxor.u32 %v947, 2147483648
        %v949 = vmul.f32 %v948, 1.442695
        %v950 = vpow.pop %v949
        %v951 = vadd.f32 %v950, 1.0
        %v952 = vrcp.pop %v951
        %v953 = vmul.f32 1.0, %v952
        %v955 = vrot.slane %v947, 2
        %v957 = vxor.u32 %v955, 2147483648
        %v958 = vmul.f32 %v957, 1.442695
        %v959 = vpow.pop %v958
        %v960 = vadd.f32 %v959, 1.0
        %v961 = vrcp.pop %v960
        %v962 = vmul.f32 1.0, %v961
        %v963 = vrot.slane %v947, 4
        %v965 = vtanh.pop %v963
        %v966 = vrot.slane %v947, 6
        %v968 = vxor.u32 %v966, 2147483648
        %v969 = vmul.f32 %v968, 1.442695
        %v970 = vpow.pop %v969
        %v971 = vadd.f32 %v970, 1.0
        %v972 = vrcp.pop %v971
        %v973 = vmul.f32 1.0, %v972
        %v974 = vmul.f32 %v962, %v838
        %v975 = vmul.f32 %v953, %v965
        %v976 = vadd.f32 %v974, %v975
        %v977 = vtanh.pop %v976
        %v978 = vmul.f32 %v973, %v977
        %s979 = sadd.s32 %s526, 3
        %p980 = scmp.lt.s32.totalorder %s979, 8
        %s981 = scalar_select %p980, 1, 0
        %v982 = vstv %s981
        %vm983 = vcmp.eq.s32.totalorder %v982, 1
        %v984 = vsel %vm983, %v978, %v837
        %985 = vst [vmem:[#allocation2] sm:$0x3] %v984
        %v986 = vsel %vm983, %v976, %v838
        %987 = vst [vmem:[#allocation3] sm:$0x3] %v986
        %p988 = scmp.eq.s32.totalorder %s16, 1
        // Predicated region
        $region41: #{video_lstm_forward.3} parent=35 // pred_check
          %p989 = pneg %p988
        $region42: #{video_lstm_forward.3} parent=35 // pred_check_branch
          %991 = sbr.rel (%p989) target = $region44
        $region43: #{video_lstm_forward.3} parent=35 // pred_region
          %v992 = vld [vmem:[#allocation2] sm:$0x3]
          %v993 = vpack.c.bf16 %v992, %v992
          %v994 = vld [vmem:[%s2] sm:$0xf]
          %v995 = vld [vmem:[%s2 + $0x4] sm:$0xf]
          %v996 = vld [vmem:[%s2 + $0x8] sm:$0xf]
          %v997 = vld [vmem:[%s2 + $0xc] sm:$0xf]
          %v998 = vld [vmem:[%s2 + $0x10] sm:$0xf]
          %v999 = vld [vmem:[%s2 + $0x14] sm:$0xf]
          %v1000 = vld [vmem:[%s2 + $0x18] sm:$0xf]
          %v1001 = vld [vmem:[%s2 + $0x1c] sm:$0xf]
          %v1002 = vld [vmem:[%s2 + $0x20] sm:$0xf]
          %v1003 = vld [vmem:[%s2 + $0x24] sm:$0xf]
          %v1004 = vld [vmem:[%s2 + $0x28] sm:$0xf]
          %v1005 = vld [vmem:[%s2 + $0x2c] sm:$0xf]
          %v1006 = vld [vmem:[%s2 + $0x30] sm:$0xf]
          %v1007 = vld [vmem:[%s2 + $0x34] sm:$0xf]
          %v1008 = vld [vmem:[%s2 + $0x38] sm:$0xf]
          %v1009 = vld [vmem:[%s2 + $0x3c] sm:$0xf]
          %v1010 = vld [vmem:[%s3] sm:$0x1]
          %v1012 = vlaneseq
          %v1013 = vshrl.u32 %v1012, 7
          %v1014 = vsub.s32 0, %v1013
          %v1015 = vrot.slane %v1010, %v1014
          %v1033 = vunpack.c.l.b16 %v994
          %v1034 = vunpack.c.l.b16 %v995
          %v1035 = vunpack.c.l.b16 %v996
          %v1036 = vunpack.c.l.b16 %v997
          %v1037 = vunpack.c.l.b16 %v998
          %v1038 = vunpack.c.l.b16 %v999
          %v1039 = vunpack.c.l.b16 %v1000
          %v1040 = vunpack.c.l.b16 %v1001
          %v1041 = vunpack.c.l.b16 %v1002
          %v1042 = vunpack.c.l.b16 %v1003
          %v1043 = vunpack.c.l.b16 %v1004
          %v1044 = vunpack.c.l.b16 %v1005
          %v1045 = vunpack.c.l.b16 %v1006
          %v1046 = vunpack.c.l.b16 %v1007
          %v1047 = vunpack.c.l.b16 %v1008
          %v1048 = vunpack.c.l.b16 %v1009
          %v1049 = vpack.c.b16 %v1034, %v1033
          %v1050 = vpack.c.b16 %v1036, %v1035
          %v1051 = vpack.c.b16 %v1038, %v1037
          %v1052 = vpack.c.b16 %v1040, %v1039
          %v1053 = vpack.c.b16 %v1042, %v1041
          %v1054 = vpack.c.b16 %v1044, %v1043
          %v1055 = vpack.c.b16 %v1046, %v1045
          %v1056 = vpack.c.b16 %v1048, %v1047
          %1065 = vmatprep.subr.bf16.mxu0 0
          %1066 = vmatpush1.bf16.msra.mxu0 %v1056
          %1067 = vmatprep.subr.bf16.mxu0 0
          %1068 = vmatpush1.bf16.msra.mxu0 %v1055
          %1069 = vmatprep.subr.bf16.mxu0 0
          %1070 = vmatpush1.bf16.msra.mxu0 %v1054
          %1071 = vmatprep.subr.bf16.mxu0 0
          %1072 = vmatpush1.bf16.msra.mxu0 %v1053
          %1073 = vmatprep.subr.bf16.mxu0 0
          %1074 = vmatpush1.bf16.msra.mxu0 %v1052
          %1075 = vmatprep.subr.bf16.mxu0 0
          %1076 = vmatpush1.bf16.msra.mxu0 %v1051
          %1077 = vmatprep.subr.bf16.mxu0 0
          %1078 = vmatpush1.bf16.msra.mxu0 %v1050
          %1079 = vmatprep.subr.bf16.mxu0 0
          %1080 = vmatpush1.bf16.msra.mxu0 %v1049
          %1081 = vmatprep.subr.bf16.mxu0 0
          %1082 = vmatpush2.bf16.msra.mxu0 0
          %1083 = vmatprep.subr.bf16.mxu0 0
          %1084 = vmatpush2.bf16.msra.mxu0 0
          %1085 = vmatprep.subr.bf16.mxu0 0
          %1086 = vmatpush2.bf16.msra.mxu0 0
          %1087 = vmatprep.subr.bf16.mxu0 0
          %1088 = vmatpush2.bf16.msra.mxu0 0
          %1089 = vmatprep.subr.bf16.mxu0 0
          %1090 = vmatpush2.bf16.msra.mxu0 0
          %1091 = vmatprep.subr.bf16.mxu0 0
          %1092 = vmatpush2.bf16.msra.mxu0 0
          %1093 = vmatprep.subr.bf16.mxu0 0
          %1094 = vmatpush2.bf16.msra.mxu0 0
          %1095 = vmatprep.subr.bf16.mxu0 0
          %1096 = vmatpush2.bf16.msra.mxu0 0
          %1097 = vmatprep.mubr.bf16.mxu0 0
          %1098 = vmatmul.mubr.bf16.gmra.mxu0 %v993
          %v1099 = vpop.f32.mrf.mxu0
          %v1100 = vadd.f32 %v1015, %v1099
          %v1101 = vpop.f32.mrf.mxu0
          %v1102 = vpop.f32.mrf.mxu0
          %v1103 = vpop.f32.mrf.mxu0
          %1104 = vdwg.mxu0
          %1105 = vst [vmem:[#allocation4] sm:$0x3] %v1100
        $region44: #{video_lstm_forward.3} parent=35 // pred_fallthru
          _
        // Predicated region
        $region45: #{video_lstm_forward.3} parent=35 // pred_check
          %p1106 = pneg %p118
        $region46: #{video_lstm_forward.3} parent=35 // pred_check_branch
          %1108 = sbr.rel (%p1106) target = $region48
        $region47: #{video_lstm_forward.3} parent=35 // pred_region
          %s1110 = ssub.s32 32, 32
          %1111 = vsyncadd [#allocation5], %s1110
          %s1113 = sshll.u32 [#allocation4], 4
          %s1114 = int_to_ptr.vmem [resolvable:$true] %s1113
          %1116 = dma.vmem_to_hbm [thread:$0]  %s1114, 32, %s4, [#allocation5]
        $region48: #{video_lstm_forward.3} parent=35 // pred_fallthru
          _
        // Predicated region
        $region49: #{video_lstm_forward.3} parent=35 // pred_check
          %p1117 = pneg %p118
        $region50: #{video_lstm_forward.3} parent=35 // pred_check_branch
          %1119 = sbr.rel (%p1117) target = $region52
        $region51: #{video_lstm_forward.3} parent=35 // pred_region
          %1120 = dma.done [#allocation5], 32
        $region52: #{video_lstm_forward.3} parent=35 // pred_fallthru
          _
      $region36: #{video_lstm_forward.3} parent=5 // pred_fallthru
        _
      %p1121 = scmp.le.s32.totalorder 2, %s11
      // Predicated region
      $region53: #{video_lstm_forward.3} parent=5 // pred_check
        %p1122 = pneg %p1121
      $region54: #{video_lstm_forward.3} parent=5 // pred_check_branch
        %1124 = sbr.rel (%p1122) target = $region56
      $region55: #{video_lstm_forward.3} parent=5 // pred_region
        %s1125 = ssub.s32 %s11, 2
      $region56: #{video_lstm_forward.3} parent=5 // pred_fallthru
        _
    $region6: #{video_lstm_forward.3} parent=1 // loop_footer
      %s15 = sadd.s32 1, %s11
    $region7: #{video_lstm_forward.3} parent=1 // loop_footer_branch
      %10 = sbr.rel target = $region3
    $region8: #{video_lstm_forward.3} parent=1 // loop_exit
      _
    %1126 = vsyncpa [#allocation5], 1
    %s1127 = scalar_lea.sflag [#allocation5], 1
    %1128 = vsyncpa %s1127, 1

</llo_original>
